<compile_context>
chip_gen: v7x
topology: tpu7x:2x2x1
jax: 0.10.0
libtpu: 0.0.40
codegen_flags: <defaults>
</compile_context>

<pallas_src>
import numpy as np
import jax
import jax.numpy as jnp
from jax import lax
from jax.experimental import pallas as pl
from jax.experimental.pallas import tpu as pltpu

SOBEL_X = ((1.0, 0.0, -1.0), (2.0, 0.0, -2.0), (1.0, 0.0, -1.0))
SOBEL_Y = ((1.0, 2.0, 1.0), (0.0, 0.0, 0.0), (-1.0, -2.0, -1.0))
C1 = 0.01 ** 2
C2 = 0.03 ** 2

_OFF = 8   # buffer row where the current strip starts (keeps the big strip stores
           # sublane-aligned; rows OFF-2, OFF-1 hold the carried seam rows)


def _round_up(x, m):
    return -(-x // m) * m


def _band(n, wm1, w0, wp1, *, apply_to):
    """Tridiagonal conv-as-matmul matrix with zero 'same' padding baked in.

    apply_to='cols': y = x @ M gives y[:, j] = wm1*x[:, j-1] + w0*x[:, j] + wp1*x[:, j+1]
    apply_to='rows': y = M @ x gives y[i, :] = wm1*x[i-1, :] + w0*x[i, :] + wp1*x[i+1, :]
    Entries are exact small integers so the MXU path loses no precision.
    """
    i = np.arange(n)[:, None]
    j = np.arange(n)[None, :]
    d = (i - j) if apply_to == "cols" else (j - i)
    m = (np.where(d == -1, wm1, 0.0) + np.where(d == 0, w0, 0.0)
         + np.where(d == 1, wp1, 0.0))
    return jnp.asarray(m, dtype=jnp.float32)


def _make_depth_loss_kernel(tile_rows, s_pad, img_rows):
    """Kernel over one (TH, W) row strip; seam rows carried in VMEM scratch."""
    TH = tile_rows
    OFF = _OFF

    def kernel(p_ref, t_ref, bh_ref, mx_ref, my_ref,
               v111_ref, v121_ref, v101_ref, out_ref, h_ref):
        r = pl.program_id(1)

        @pl.when(r == 0)
        def _():
            out_ref[...] = jnp.zeros_like(out_ref)   # per-image accumulator init
            h_ref[...] = jnp.zeros_like(h_ref)       # zero carry + zero "below" rows

        p = p_ref[...].astype(jnp.float32)           # (TH, W)
        t = t_ref[...].astype(jnp.float32)
        d = p - t

        # ---- horizontal 3-tap passes as lane-axis matmuls on the MXU (zero column
        #      padding is encoded in the band matrices). conv linearity is used for
        #      the Sobel terms: conv(p) - conv(t) == conv(d).
        def hconv(x, m_ref):
            return jnp.dot(x, m_ref[...], preferred_element_type=jnp.float32)

        h_ref[0, OFF:OFF + TH, :] = hconv(d, mx_ref)      # Sobel-x taps [1, 0, -1]
        h_ref[1, OFF:OFF + TH, :] = hconv(d, my_ref)      # Sobel-y taps [1, 2, 1]
        h_ref[2, OFF:OFF + TH, :] = hconv(p, bh_ref)      # box taps    [1, 1, 1]
        h_ref[3, OFF:OFF + TH, :] = hconv(t, bh_ref)
        h_ref[4, OFF:OFF + TH, :] = hconv(p * p, bh_ref)
        h_ref[5, OFF:OFF + TH, :] = hconv(t * t, bh_ref)
        h_ref[6, OFF:OFF + TH, :] = hconv(p * t, bh_ref)

        # ---- vertical 3-tap passes as sublane-axis matmuls on the MXU over the
        #      carry buffer (previous strip's last 2 rows sit at OFF-2, OFF-1).
        def vconv(v_ref, k):
            return jnp.dot(v_ref[...], h_ref[k], preferred_element_type=jnp.float32)

        gx = vconv(v121_ref, 0)
        gy = vconv(v101_ref, 1)
        mu_x = vconv(v111_ref, 2) * (1.0 / 9.0)
        mu_y = vconv(v111_ref, 3) * (1.0 / 9.0)
        e_xx = vconv(v111_ref, 4) * (1.0 / 9.0)
        e_yy = vconv(v111_ref, 5) * (1.0 / 9.0)
        e_xy = vconv(v111_ref, 6) * (1.0 / 9.0)

        sig_x = e_xx - mu_x * mu_x
        sig_y = e_yy - mu_y * mu_y
        sig_xy = e_xy - mu_x * mu_y
        num = (2.0 * mu_x * mu_y + C1) * (2.0 * sig_xy + C2)
        den = (mu_x * mu_x + mu_y * mu_y + C1) * (sig_x + sig_y + C2)
        ssim_map = num / den   # exact divide; VPU has slack now that filters run on the MXU

        # ---- rows of the carry buffer finished at this step (full 3-row stencil
        #      available), restricted to real image rows.
        last = r == pl.num_programs(1) - 1
        c = lax.broadcasted_iota(jnp.int32, (s_pad, 1), 0)
        g = r * TH + (c - OFF)                               # global image row of buffer row c
        c_hi = jnp.where(last, OFF + TH - 1, OFF + TH - 2)   # last row's "below" neighbor is zero
        maskf = ((c >= OFF - 1) & (c <= c_hi)
                 & (g >= 0) & (g < img_rows)).astype(jnp.float32)

        # ---- per-lane partial sums; the cross-lane reduce is finished in the wrapper.
        l1_p = jnp.sum(jnp.abs(d), axis=0, keepdims=True)            # pad rows are zero
        gx_p = jnp.sum(jnp.abs(gx) * maskf, axis=0, keepdims=True)
        gy_p = jnp.sum(jnp.abs(gy) * maskf, axis=0, keepdims=True)
        ss_p = jnp.sum(ssim_map * maskf, axis=0, keepdims=True)
        out_ref[...] += jnp.concatenate([l1_p, gx_p, gy_p, ss_p], axis=0)

        # ---- carry: last 2 horizontal-pass rows of this strip seed the next strip.
        for k in range(7):
            h_ref[k, OFF - 2:OFF, :] = h_ref[k, OFF + TH - 2:OFF + TH, :]

    return kernel


def depth_loss(pred, target, weight, *, max_tile_rows=256):
    """pred, target: (B, 1, H, W) (NCHW, C == 1).  Returns the scalar DepthLoss."""
    B, C, H, W = pred.shape
    assert C == 1, "GradientLoss uses Conv2d(1, 1, 3): single-channel inputs"
    assert pred.shape == target.shape

    # Row tiling: whole image per step when it fits, otherwise fixed sublane-aligned
    # strips.  No divisor search (prime H can no longer degenerate to 1-row strips).
    if H <= max_tile_rows:
        TH = H
        Hp = H
    else:
        TH = _round_up(max_tile_rows, 8)
        Hp = _round_up(H, TH)
    nt = Hp // TH
    s_pad = _round_up(TH + _OFF + 1, 8)   # strip + 2 carry rows + guaranteed zero row below

    p = pred.reshape(B, H, W)     # keep the input dtype; the only f32 cast is in-kernel
    t = target.reshape(B, H, W)
    if Hp != H:
        # Zero rows below the image == the convs' zero "same" padding; excluded from
        # the means by the in-kernel row mask.  Only hit when H > max_tile_rows.
        p = jnp.pad(p, ((0, 0), (0, Hp - H), (0, 0)))
        t = jnp.pad(t, ((0, 0), (0, Hp - H), (0, 0)))

    # Conv-as-matmul band matrices (exact integer taps, fetched into VMEM once).
    bh = _band(W, 1.0, 1.0, 1.0, apply_to="cols")       # box horizontal
    mx = _band(W, 1.0, 0.0, -1.0, apply_to="cols")      # Sobel-x horizontal
    my = _band(W, 1.0, 2.0, 1.0, apply_to="cols")       # Sobel-y horizontal
    v111 = _band(s_pad, 1.0, 1.0, 1.0, apply_to="rows")  # box vertical
    v121 = _band(s_pad, 1.0, 2.0, 1.0, apply_to="rows")  # Sobel-x vertical
    v101 = _band(s_pad, 1.0, 0.0, -1.0, apply_to="rows")  # Sobel-y vertical

    # VMEM budget from actual tile sizes; cap at 40 MiB so v7x (64 MiB physical) is safe.
    in_bytes = p.dtype.itemsize
    est = (2 * 2 * TH * W * in_bytes                     # 2 inputs x 2 pipeline buffers
           + 2 * 4 * (3 * W * W + 3 * s_pad * s_pad)     # band matrices (double-buffered)
           + 4 * 7 * s_pad * W                           # carry scratch
           + 4 * 12 * s_pad * W)                         # live f32 temporaries
    vmem_limit = int(min(40 * 1024 * 1024, max(16 * 1024 * 1024, int(1.3 * est))))

    grid_spec = pltpu.PrefetchScalarGridSpec(
        num_scalar_prefetch=0,
        grid=(B, nt),                                     # r (seam carry) must stay sequential
        in_specs=[
            pl.BlockSpec((pl.Squeezed(), TH, W), lambda b, r: (b, r, 0)),
            pl.BlockSpec((pl.Squeezed(), TH, W), lambda b, r: (b, r, 0)),
            pl.BlockSpec((W, W), lambda b, r: (0, 0)),
            pl.BlockSpec((W, W), lambda b, r: (0, 0)),
            pl.BlockSpec((W, W), lambda b, r: (0, 0)),
            pl.BlockSpec((s_pad, s_pad), lambda b, r: (0, 0)),
            pl.BlockSpec((s_pad, s_pad), lambda b, r: (0, 0)),
            pl.BlockSpec((s_pad, s_pad), lambda b, r: (0, 0)),
        ],
        out_specs=pl.BlockSpec((pl.Squeezed(), 4, W), lambda b, r: (b, 0, 0)),
        scratch_shapes=[pltpu.VMEM((7, s_pad, W), jnp.float32)],
    )

    partial = pl.pallas_call(
        _make_depth_loss_kernel(TH, s_pad, H),
        out_shape=jax.ShapeDtypeStruct((B, 4, W), jnp.float32),
        grid_spec=grid_spec,
        compiler_params=pltpu.CompilerParams(
            dimension_semantics=("parallel", "arbitrary"),
            vmem_limit_bytes=vmem_limit,
        ),
    )(p, t, bh, mx, my, v111, v121, v101)

    sums = jnp.sum(partial, axis=(0, 2))      # finish the cross-lane reduce here
    n = jnp.float32(B * H * W)                # "same" convs keep the element count
    l1_mean = sums[0] / n
    grad_loss = (sums[1] + sums[2]) / n
    ssim_mean = sums[3] / n
    return weight * l1_mean + grad_loss + (1.0 - ssim_mean) / 2.0


# ------------------------- pure-JAX reference ------------------------------
def _conv_ref(x, w):
    return lax.conv_general_dilated(
        x, w, window_strides=(1, 1), padding=((1, 1), (1, 1)),
        dimension_numbers=("NCHW", "OIHW", "NCHW"))


def depth_loss_ref(pred, target, weight):
    kx = jnp.array(SOBEL_X, jnp.float32).reshape(1, 1, 3, 3)
    ky = jnp.array(SOBEL_Y, jnp.float32).reshape(1, 1, 3, 3)
    kb = jnp.full((1, 1, 3, 3), 1.0 / 9.0, jnp.float32)
    l1 = jnp.mean(jnp.abs(pred - target))
    gx = jnp.mean(jnp.abs(_conv_ref(pred, kx) - _conv_ref(target, kx)))
    gy = jnp.mean(jnp.abs(_conv_ref(pred, ky) - _conv_ref(target, ky)))
    mu_x = _conv_ref(pred, kb)
    mu_y = _conv_ref(target, kb)
    sig_x = _conv_ref(pred * pred, kb) - mu_x ** 2
    sig_y = _conv_ref(target * target, kb) - mu_y ** 2
    sig_xy = _conv_ref(pred * target, kb) - mu_x * mu_y
    ssim = jnp.mean(((2 * mu_x * mu_y + C1) * (2 * sig_xy + C2))
                    / ((mu_x ** 2 + mu_y ** 2 + C1) * (sig_x + sig_y + C2)))
    return weight * l1 + gx + gy + (1.0 - ssim) / 2.0


if __name__ == "__main__":
    key = jax.random.PRNGKey(0)
    k1, k2 = jax.random.split(key)
    weight = 0.5  # DepthLoss(weight=...) — deterministic in-script choice

    # Lane-dense W (multiple of 128); max_tile_rows=16 forces the multi-strip carry
    # path (grid = (2, 2)) so the seam handling is exercised.  Production images just
    # use the default max_tile_rows=256 (usually a single strip per image).
    B, C, H, W = 2, 1, 32, 128
    pred = jax.random.uniform(k1, (B, C, H, W), dtype=jnp.float32)
    target = jax.random.uniform(k2, (B, C, H, W), dtype=jnp.float32)

    out = jax.block_until_ready(depth_loss(pred, target, weight, max_tile_rows=16))
    ref = jax.block_until_ready(depth_loss_ref(pred, target, weight))
    if not jnp.allclose(out, ref, rtol=2e-3, atol=2e-3):
        raise AssertionError(f"mismatch: pallas={float(out)} ref={float(ref)}")

    # Ragged-H path: H not a multiple of the strip height -> small zero-row pad +
    # in-kernel row mask (no divisor search, no per-image restriction on H).
    H2 = 40
    pred2 = jax.random.uniform(k1, (B, C, H2, W), dtype=jnp.float32)
    target2 = jax.random.uniform(k2, (B, C, H2, W), dtype=jnp.float32)
    out2 = jax.block_until_ready(depth_loss(pred2, target2, weight, max_tile_rows=16))
    ref2 = jax.block_until_ready(depth_loss_ref(pred2, target2, weight))
    if not jnp.allclose(out2, ref2, rtol=2e-3, atol=2e-3):
        raise AssertionError(f"mismatch (ragged): pallas={float(out2)} ref={float(ref2)}")

    print("KERNEL_OK")
</pallas_src>

<mosaic_0001>
module attributes {stable_mosaic.version = 11 : i64} {
  func.func @kernel(%arg0: i32, %arg1: i32, %arg2: memref<1x16x128xf32, #tpu.memory_space<vmem>>, %arg3: memref<1x16x128xf32, #tpu.memory_space<vmem>>, %arg4: memref<128x128xf32, #tpu.memory_space<vmem>>, %arg5: memref<128x128xf32, #tpu.memory_space<vmem>>, %arg6: memref<128x128xf32, #tpu.memory_space<vmem>>, %arg7: memref<32x32xf32, #tpu.memory_space<vmem>>, %arg8: memref<32x32xf32, #tpu.memory_space<vmem>>, %arg9: memref<32x32xf32, #tpu.memory_space<vmem>>, %arg10: memref<1x4x128xf32, #tpu.memory_space<vmem>>, %arg11: memref<7x32x128xf32, #tpu.memory_space<vmem>>) attributes {dimension_semantics = [#tpu.dimension_semantics<parallel>, #tpu.dimension_semantics<arbitrary>], iteration_bounds = array<i64: 2, 2>, scalar_prefetch = 0 : i64, scratch_operands = 1 : i64, tpu.core_type = #tpu.core_type<tc>, window_params = [{transform_indices = @transform_0, window_bounds = array<i64: 1, 16, 128>}, {transform_indices = @transform_1, window_bounds = array<i64: 1, 16, 128>}, {pipeline_mode = #tpu.pipeline_mode<synchronous>, transform_indices = @transform_2, window_bounds = array<i64: 128, 128>}, {pipeline_mode = #tpu.pipeline_mode<synchronous>, transform_indices = @transform_3, window_bounds = array<i64: 128, 128>}, {pipeline_mode = #tpu.pipeline_mode<synchronous>, transform_indices = @transform_4, window_bounds = array<i64: 128, 128>}, {pipeline_mode = #tpu.pipeline_mode<synchronous>, transform_indices = @transform_5, window_bounds = array<i64: 32, 32>}, {pipeline_mode = #tpu.pipeline_mode<synchronous>, transform_indices = @transform_6, window_bounds = array<i64: 32, 32>}, {pipeline_mode = #tpu.pipeline_mode<synchronous>, transform_indices = @transform_7, window_bounds = array<i64: 32, 32>}, {transform_indices = @transform_8, window_bounds = array<i64: 1, 4, 128>}]} {
    %c0_i32 = arith.constant 0 : i32
    %0 = arith.cmpi eq, %arg1, %c0_i32 : i32
    %1 = arith.extui %0 : i1 to i32
    %c0_i32_0 = arith.constant 0 : i32
    %2 = arith.cmpi ne, %1, %c0_i32_0 : i32
    scf.if %2 {
      %cst_145 = arith.constant 0.000000e+00 : f32
      %190 = vector.broadcast %cst_145 : f32 to vector<4x128xf32>
      %c0_146 = arith.constant 0 : index
      %c0_147 = arith.constant 0 : index
      %c0_148 = arith.constant 0 : index
      %191 = vector.load %arg10[%c0_146, %c0_147, %c0_148] : memref<1x4x128xf32, #tpu.memory_space<vmem>>, vector<1x4x128xf32>
      %192 = vector.shape_cast %191 : vector<1x4x128xf32> to vector<4x128xf32>
      %193 = vector.shape_cast %190 : vector<4x128xf32> to vector<1x4x128xf32>
      tpu.vector_store %arg10[%c0_146, %c0_147, %c0_148], %193 {strides = array<i32>} : memref<1x4x128xf32, #tpu.memory_space<vmem>>, vector<1x4x128xf32>,
      %cst_149 = arith.constant 0.000000e+00 : f32
      %194 = vector.broadcast %cst_149 : f32 to vector<7x32x128xf32>
      %c0_150 = arith.constant 0 : index
      %c0_151 = arith.constant 0 : index
      %c0_152 = arith.constant 0 : index
      %195 = vector.load %arg11[%c0_150, %c0_151, %c0_152] : memref<7x32x128xf32, #tpu.memory_space<vmem>>, vector<7x32x128xf32>
      tpu.vector_store %arg11[%c0_150, %c0_151, %c0_152], %194 {strides = array<i32>} : memref<7x32x128xf32, #tpu.memory_space<vmem>>, vector<7x32x128xf32>,
    } else {
    }
    %c0 = arith.constant 0 : index
    %c0_1 = arith.constant 0 : index
    %c0_2 = arith.constant 0 : index
    %3 = vector.load %arg2[%c0, %c0_1, %c0_2] : memref<1x16x128xf32, #tpu.memory_space<vmem>>, vector<1x16x128xf32>
    %4 = vector.shape_cast %3 : vector<1x16x128xf32> to vector<16x128xf32>
    %c0_3 = arith.constant 0 : index
    %c0_4 = arith.constant 0 : index
    %c0_5 = arith.constant 0 : index
    %5 = vector.load %arg3[%c0_3, %c0_4, %c0_5] : memref<1x16x128xf32, #tpu.memory_space<vmem>>, vector<1x16x128xf32>
    %6 = vector.shape_cast %5 : vector<1x16x128xf32> to vector<16x128xf32>
    %7 = arith.subf %4, %6 : vector<16x128xf32>
    %c0_6 = arith.constant 0 : index
    %c0_7 = arith.constant 0 : index
    %8 = vector.load %arg5[%c0_6, %c0_7] : memref<128x128xf32, #tpu.memory_space<vmem>>, vector<128x128xf32>
    %cst = arith.constant dense<0.000000e+00> : vector<16x128xf32>
    %9 = tpu.matmul %7, %8, %cst {dimension_numbers = #tpu.dot_dimension_numbers<[1], [0], [0], [1], [0, 0, 1, 1], [], []>} : vector<16x128xf32>, vector<128x128xf32>, vector<16x128xf32> -> vector<16x128xf32>
    %c0_8 = arith.constant 0 : index
    %c8 = arith.constant 8 : index
    %c0_9 = arith.constant 0 : index
    %10 = vector.load %arg11[%c0_8, %c8, %c0_9] : memref<7x32x128xf32, #tpu.memory_space<vmem>>, vector<1x16x128xf32>
    %11 = vector.shape_cast %10 : vector<1x16x128xf32> to vector<16x128xf32>
    %12 = vector.shape_cast %9 : vector<16x128xf32> to vector<1x16x128xf32>
    tpu.vector_store %arg11[%c0_8, %c8, %c0_9], %12 {strides = array<i32>} : memref<7x32x128xf32, #tpu.memory_space<vmem>>, vector<1x16x128xf32>,
    %c0_10 = arith.constant 0 : index
    %c0_11 = arith.constant 0 : index
    %13 = vector.load %arg6[%c0_10, %c0_11] : memref<128x128xf32, #tpu.memory_space<vmem>>, vector<128x128xf32>
    %cst_12 = arith.constant dense<0.000000e+00> : vector<16x128xf32>
    %14 = tpu.matmul %7, %13, %cst_12 {dimension_numbers = #tpu.dot_dimension_numbers<[1], [0], [0], [1], [0, 0, 1, 1], [], []>} : vector<16x128xf32>, vector<128x128xf32>, vector<16x128xf32> -> vector<16x128xf32>
    %c1 = arith.constant 1 : index
    %c8_13 = arith.constant 8 : index
    %c0_14 = arith.constant 0 : index
    %15 = vector.load %arg11[%c1, %c8_13, %c0_14] : memref<7x32x128xf32, #tpu.memory_space<vmem>>, vector<1x16x128xf32>
    %16 = vector.shape_cast %15 : vector<1x16x128xf32> to vector<16x128xf32>
    %17 = vector.shape_cast %14 : vector<16x128xf32> to vector<1x16x128xf32>
    tpu.vector_store %arg11[%c1, %c8_13, %c0_14], %17 {strides = array<i32>} : memref<7x32x128xf32, #tpu.memory_space<vmem>>, vector<1x16x128xf32>,
    %c0_15 = arith.constant 0 : index
    %c0_16 = arith.constant 0 : index
    %18 = vector.load %arg4[%c0_15, %c0_16] : memref<128x128xf32, #tpu.memory_space<vmem>>, vector<128x128xf32>
    %cst_17 = arith.constant dense<0.000000e+00> : vector<16x128xf32>
    %19 = tpu.matmul %4, %18, %cst_17 {dimension_numbers = #tpu.dot_dimension_numbers<[1], [0], [0], [1], [0, 0, 1, 1], [], []>} : vector<16x128xf32>, vector<128x128xf32>, vector<16x128xf32> -> vector<16x128xf32>
    %c2 = arith.constant 2 : index
    %c8_18 = arith.constant 8 : index
    %c0_19 = arith.constant 0 : index
    %20 = vector.load %arg11[%c2, %c8_18, %c0_19] : memref<7x32x128xf32, #tpu.memory_space<vmem>>, vector<1x16x128xf32>
    %21 = vector.shape_cast %20 : vector<1x16x128xf32> to vector<16x128xf32>
    %22 = vector.shape_cast %19 : vector<16x128xf32> to vector<1x16x128xf32>
    tpu.vector_store %arg11[%c2, %c8_18, %c0_19], %22 {strides = array<i32>} : memref<7x32x128xf32, #tpu.memory_space<vmem>>, vector<1x16x128xf32>,
    %c0_20 = arith.constant 0 : index
    %c0_21 = arith.constant 0 : index
    %23 = vector.load %arg4[%c0_20, %c0_21] : memref<128x128xf32, #tpu.memory_space<vmem>>, vector<128x128xf32>
    %cst_22 = arith.constant dense<0.000000e+00> : vector<16x128xf32>
    %24 = tpu.matmul %6, %23, %cst_22 {dimension_numbers = #tpu.dot_dimension_numbers<[1], [0], [0], [1], [0, 0, 1, 1], [], []>} : vector<16x128xf32>, vector<128x128xf32>, vector<16x128xf32> -> vector<16x128xf32>
    %c3 = arith.constant 3 : index
    %c8_23 = arith.constant 8 : index
    %c0_24 = arith.constant 0 : index
    %25 = vector.load %arg11[%c3, %c8_23, %c0_24] : memref<7x32x128xf32, #tpu.memory_space<vmem>>, vector<1x16x128xf32>
    %26 = vector.shape_cast %25 : vector<1x16x128xf32> to vector<16x128xf32>
    %27 = vector.shape_cast %24 : vector<16x128xf32> to vector<1x16x128xf32>
    tpu.vector_store %arg11[%c3, %c8_23, %c0_24], %27 {strides = array<i32>} : memref<7x32x128xf32, #tpu.memory_space<vmem>>, vector<1x16x128xf32>,
    %28 = arith.mulf %4, %4 : vector<16x128xf32>
    %c0_25 = arith.constant 0 : index
    %c0_26 = arith.constant 0 : index
    %29 = vector.load %arg4[%c0_25, %c0_26] : memref<128x128xf32, #tpu.memory_space<vmem>>, vector<128x128xf32>
    %cst_27 = arith.constant dense<0.000000e+00> : vector<16x128xf32>
    %30 = tpu.matmul %28, %29, %cst_27 {dimension_numbers = #tpu.dot_dimension_numbers<[1], [0], [0], [1], [0, 0, 1, 1], [], []>} : vector<16x128xf32>, vector<128x128xf32>, vector<16x128xf32> -> vector<16x128xf32>
    %c4 = arith.constant 4 : index
    %c8_28 = arith.constant 8 : index
    %c0_29 = arith.constant 0 : index
    %31 = vector.load %arg11[%c4, %c8_28, %c0_29] : memref<7x32x128xf32, #tpu.memory_space<vmem>>, vector<1x16x128xf32>
    %32 = vector.shape_cast %31 : vector<1x16x128xf32> to vector<16x128xf32>
    %33 = vector.shape_cast %30 : vector<16x128xf32> to vector<1x16x128xf32>
    tpu.vector_store %arg11[%c4, %c8_28, %c0_29], %33 {strides = array<i32>} : memref<7x32x128xf32, #tpu.memory_space<vmem>>, vector<1x16x128xf32>,
    %34 = arith.mulf %6, %6 : vector<16x128xf32>
    %c0_30 = arith.constant 0 : index
    %c0_31 = arith.constant 0 : index
    %35 = vector.load %arg4[%c0_30, %c0_31] : memref<128x128xf32, #tpu.memory_space<vmem>>, vector<128x128xf32>
    %cst_32 = arith.constant dense<0.000000e+00> : vector<16x128xf32>
    %36 = tpu.matmul %34, %35, %cst_32 {dimension_numbers = #tpu.dot_dimension_numbers<[1], [0], [0], [1], [0, 0, 1, 1], [], []>} : vector<16x128xf32>, vector<128x128xf32>, vector<16x128xf32> -> vector<16x128xf32>
    %c5 = arith.constant 5 : index
    %c8_33 = arith.constant 8 : index
    %c0_34 = arith.constant 0 : index
    %37 = vector.load %arg11[%c5, %c8_33, %c0_34] : memref<7x32x128xf32, #tpu.memory_space<vmem>>, vector<1x16x128xf32>
    %38 = vector.shape_cast %37 : vector<1x16x128xf32> to vector<16x128xf32>
    %39 = vector.shape_cast %36 : vector<16x128xf32> to vector<1x16x128xf32>
    tpu.vector_store %arg11[%c5, %c8_33, %c0_34], %39 {strides = array<i32>} : memref<7x32x128xf32, #tpu.memory_space<vmem>>, vector<1x16x128xf32>,
    %40 = arith.mulf %4, %6 : vector<16x128xf32>
    %c0_35 = arith.constant 0 : index
    %c0_36 = arith.constant 0 : index
    %41 = vector.load %arg4[%c0_35, %c0_36] : memref<128x128xf32, #tpu.memory_space<vmem>>, vector<128x128xf32>
    %cst_37 = arith.constant dense<0.000000e+00> : vector<16x128xf32>
    %42 = tpu.matmul %40, %41, %cst_37 {dimension_numbers = #tpu.dot_dimension_numbers<[1], [0], [0], [1], [0, 0, 1, 1], [], []>} : vector<16x128xf32>, vector<128x128xf32>, vector<16x128xf32> -> vector<16x128xf32>
    %c6 = arith.constant 6 : index
    %c8_38 = arith.constant 8 : index
    %c0_39 = arith.constant 0 : index
    %43 = vector.load %arg11[%c6, %c8_38, %c0_39] : memref<7x32x128xf32, #tpu.memory_space<vmem>>, vector<1x16x128xf32>
    %44 = vector.shape_cast %43 : vector<1x16x128xf32> to vector<16x128xf32>
    %45 = vector.shape_cast %42 : vector<16x128xf32> to vector<1x16x128xf32>
    tpu.vector_store %arg11[%c6, %c8_38, %c0_39], %45 {strides = array<i32>} : memref<7x32x128xf32, #tpu.memory_space<vmem>>, vector<1x16x128xf32>,
    %c0_40 = arith.constant 0 : index
    %c0_41 = arith.constant 0 : index
    %46 = vector.load %arg8[%c0_40, %c0_41] : memref<32x32xf32, #tpu.memory_space<vmem>>, vector<32x32xf32>
    %c0_42 = arith.constant 0 : index
    %c0_43 = arith.constant 0 : index
    %c0_44 = arith.constant 0 : index
    %47 = vector.load %arg11[%c0_42, %c0_43, %c0_44] : memref<7x32x128xf32, #tpu.memory_space<vmem>>, vector<1x32x128xf32>
    %48 = vector.shape_cast %47 : vector<1x32x128xf32> to vector<32x128xf32>
    %cst_45 = arith.constant dense<0.000000e+00> : vector<32x128xf32>
    %49 = tpu.matmul %46, %48, %cst_45 {dimension_numbers = #tpu.dot_dimension_numbers<[1], [0], [0], [1], [0, 0, 1, 1], [], []>} : vector<32x32xf32>, vector<32x128xf32>, vector<32x128xf32> -> vector<32x128xf32>
    %c0_46 = arith.constant 0 : index
    %c0_47 = arith.constant 0 : index
    %50 = vector.load %arg9[%c0_46, %c0_47] : memref<32x32xf32, #tpu.memory_space<vmem>>, vector<32x32xf32>
    %c1_48 = arith.constant 1 : index
    %c0_49 = arith.constant 0 : index
    %c0_50 = arith.constant 0 : index
    %51 = vector.load %arg11[%c1_48, %c0_49, %c0_50] : memref<7x32x128xf32, #tpu.memory_space<vmem>>, vector<1x32x128xf32>
    %52 = vector.shape_cast %51 : vector<1x32x128xf32> to vector<32x128xf32>
    %cst_51 = arith.constant dense<0.000000e+00> : vector<32x128xf32>
    %53 = tpu.matmul %50, %52, %cst_51 {dimension_numbers = #tpu.dot_dimension_numbers<[1], [0], [0], [1], [0, 0, 1, 1], [], []>} : vector<32x32xf32>, vector<32x128xf32>, vector<32x128xf32> -> vector<32x128xf32>
    %c0_52 = arith.constant 0 : index
    %c0_53 = arith.constant 0 : index
    %54 = vector.load %arg7[%c0_52, %c0_53] : memref<32x32xf32, #tpu.memory_space<vmem>>, vector<32x32xf32>
    %c2_54 = arith.constant 2 : index
    %c0_55 = arith.constant 0 : index
    %c0_56 = arith.constant 0 : index
    %55 = vector.load %arg11[%c2_54, %c0_55, %c0_56] : memref<7x32x128xf32, #tpu.memory_space<vmem>>, vector<1x32x128xf32>
    %56 = vector.shape_cast %55 : vector<1x32x128xf32> to vector<32x128xf32>
    %cst_57 = arith.constant dense<0.000000e+00> : vector<32x128xf32>
    %57 = tpu.matmul %54, %56, %cst_57 {dimension_numbers = #tpu.dot_dimension_numbers<[1], [0], [0], [1], [0, 0, 1, 1], [], []>} : vector<32x32xf32>, vector<32x128xf32>, vector<32x128xf32> -> vector<32x128xf32>
    %cst_58 = arith.constant 0.111111112 : f32
    %58 = vector.broadcast %cst_58 : f32 to vector<32x128xf32>
    %59 = arith.mulf %57, %58 : vector<32x128xf32>
    %c0_59 = arith.constant 0 : index
    %c0_60 = arith.constant 0 : index
    %60 = vector.load %arg7[%c0_59, %c0_60] : memref<32x32xf32, #tpu.memory_space<vmem>>, vector<32x32xf32>
    %c3_61 = arith.constant 3 : index
    %c0_62 = arith.constant 0 : index
    %c0_63 = arith.constant 0 : index
    %61 = vector.load %arg11[%c3_61, %c0_62, %c0_63] : memref<7x32x128xf32, #tpu.memory_space<vmem>>, vector<1x32x128xf32>
    %62 = vector.shape_cast %61 : vector<1x32x128xf32> to vector<32x128xf32>
    %cst_64 = arith.constant dense<0.000000e+00> : vector<32x128xf32>
    %63 = tpu.matmul %60, %62, %cst_64 {dimension_numbers = #tpu.dot_dimension_numbers<[1], [0], [0], [1], [0, 0, 1, 1], [], []>} : vector<32x32xf32>, vector<32x128xf32>, vector<32x128xf32> -> vector<32x128xf32>
    %cst_65 = arith.constant 0.111111112 : f32
    %64 = vector.broadcast %cst_65 : f32 to vector<32x128xf32>
    %65 = arith.mulf %63, %64 : vector<32x128xf32>
    %c0_66 = arith.constant 0 : index
    %c0_67 = arith.constant 0 : index
    %66 = vector.load %arg7[%c0_66, %c0_67] : memref<32x32xf32, #tpu.memory_space<vmem>>, vector<32x32xf32>
    %c4_68 = arith.constant 4 : index
    %c0_69 = arith.constant 0 : index
    %c0_70 = arith.constant 0 : index
    %67 = vector.load %arg11[%c4_68, %c0_69, %c0_70] : memref<7x32x128xf32, #tpu.memory_space<vmem>>, vector<1x32x128xf32>
    %68 = vector.shape_cast %67 : vector<1x32x128xf32> to vector<32x128xf32>
    %cst_71 = arith.constant dense<0.000000e+00> : vector<32x128xf32>
    %69 = tpu.matmul %66, %68, %cst_71 {dimension_numbers = #tpu.dot_dimension_numbers<[1], [0], [0], [1], [0, 0, 1, 1], [], []>} : vector<32x32xf32>, vector<32x128xf32>, vector<32x128xf32> -> vector<32x128xf32>
    %cst_72 = arith.constant 0.111111112 : f32
    %70 = vector.broadcast %cst_72 : f32 to vector<32x128xf32>
    %71 = arith.mulf %69, %70 : vector<32x128xf32>
    %c0_73 = arith.constant 0 : index
    %c0_74 = arith.constant 0 : index
    %72 = vector.load %arg7[%c0_73, %c0_74] : memref<32x32xf32, #tpu.memory_space<vmem>>, vector<32x32xf32>
    %c5_75 = arith.constant 5 : index
    %c0_76 = arith.constant 0 : index
    %c0_77 = arith.constant 0 : index
    %73 = vector.load %arg11[%c5_75, %c0_76, %c0_77] : memref<7x32x128xf32, #tpu.memory_space<vmem>>, vector<1x32x128xf32>
    %74 = vector.shape_cast %73 : vector<1x32x128xf32> to vector<32x128xf32>
    %cst_78 = arith.constant dense<0.000000e+00> : vector<32x128xf32>
    %75 = tpu.matmul %72, %74, %cst_78 {dimension_numbers = #tpu.dot_dimension_numbers<[1], [0], [0], [1], [0, 0, 1, 1], [], []>} : vector<32x32xf32>, vector<32x128xf32>, vector<32x128xf32> -> vector<32x128xf32>
    %cst_79 = arith.constant 0.111111112 : f32
    %76 = vector.broadcast %cst_79 : f32 to vector<32x128xf32>
    %77 = arith.mulf %75, %76 : vector<32x128xf32>
    %c0_80 = arith.constant 0 : index
    %c0_81 = arith.constant 0 : index
    %78 = vector.load %arg7[%c0_80, %c0_81] : memref<32x32xf32, #tpu.memory_space<vmem>>, vector<32x32xf32>
    %c6_82 = arith.constant 6 : index
    %c0_83 = arith.constant 0 : index
    %c0_84 = arith.constant 0 : index
    %79 = vector.load %arg11[%c6_82, %c0_83, %c0_84] : memref<7x32x128xf32, #tpu.memory_space<vmem>>, vector<1x32x128xf32>
    %80 = vector.shape_cast %79 : vector<1x32x128xf32> to vector<32x128xf32>
    %cst_85 = arith.constant dense<0.000000e+00> : vector<32x128xf32>
    %81 = tpu.matmul %78, %80, %cst_85 {dimension_numbers = #tpu.dot_dimension_numbers<[1], [0], [0], [1], [0, 0, 1, 1], [], []>} : vector<32x32xf32>, vector<32x128xf32>, vector<32x128xf32> -> vector<32x128xf32>
    %cst_86 = arith.constant 0.111111112 : f32
    %82 = vector.broadcast %cst_86 : f32 to vector<32x128xf32>
    %83 = arith.mulf %81, %82 : vector<32x128xf32>
    %84 = arith.mulf %59, %59 : vector<32x128xf32>
    %85 = arith.subf %71, %84 : vector<32x128xf32>
    %86 = arith.mulf %65, %65 : vector<32x128xf32>
    %87 = arith.subf %77, %86 : vector<32x128xf32>
    %88 = arith.mulf %59, %65 : vector<32x128xf32>
    %89 = arith.subf %83, %88 : vector<32x128xf32>
    %cst_87 = arith.constant 2.000000e+00 : f32
    %90 = vector.broadcast %cst_87 : f32 to vector<32x128xf32>
    %91 = arith.mulf %90, %59 : vector<32x128xf32>
    %92 = arith.mulf %91, %65 : vector<32x128xf32>
    %cst_88 = arith.constant 9.99999974E-5 : f32
    %93 = vector.broadcast %cst_88 : f32 to vector<32x128xf32>
    %94 = arith.addf %92, %93 : vector<32x128xf32>
    %cst_89 = arith.constant 2.000000e+00 : f32
    %95 = vector.broadcast %cst_89 : f32 to vector<32x128xf32>
    %96 = arith.mulf %95, %89 : vector<32x128xf32>
    %cst_90 = arith.constant 8.99999984E-4 : f32
    %97 = vector.broadcast %cst_90 : f32 to vector<32x128xf32>
    %98 = arith.addf %96, %97 : vector<32x128xf32>
    %99 = arith.mulf %94, %98 : vector<32x128xf32>
    %100 = arith.mulf %59, %59 : vector<32x128xf32>
    %101 = arith.mulf %65, %65 : vector<32x128xf32>
    %102 = arith.addf %100, %101 : vector<32x128xf32>
    %cst_91 = arith.constant 9.99999974E-5 : f32
    %103 = vector.broadcast %cst_91 : f32 to vector<32x128xf32>
    %104 = arith.addf %102, %103 : vector<32x128xf32>
    %105 = arith.addf %85, %87 : vector<32x128xf32>
    %cst_92 = arith.constant 8.99999984E-4 : f32
    %106 = vector.broadcast %cst_92 : f32 to vector<32x128xf32>
    %107 = arith.addf %105, %106 : vector<32x128xf32>
    %108 = arith.mulf %104, %107 : vector<32x128xf32>
    %109 = arith.divf %99, %108 : vector<32x128xf32>
    %c1_i32 = arith.constant 1 : i32
    %110 = arith.cmpi eq, %arg1, %c1_i32 : i32
    %111 = tpu.iota {dimensions = array<i32: 0>} : vector<32x1xi32>
    %c16_i32 = arith.constant 16 : i32
    %112 = arith.muli %arg1, %c16_i32 : i32
    %c8_i32 = arith.constant 8 : i32
    %113 = vector.broadcast %c8_i32 : i32 to vector<32x1xi32>
    %114 = arith.subi %111, %113 : vector<32x1xi32>
    %115 = vector.broadcast %112 : i32 to vector<32x1xi32>
    %116 = arith.addi %115, %114 : vector<32x1xi32>
    %c23_i32 = arith.constant 23 : i32
    %c22_i32 = arith.constant 22 : i32
    %117 = arith.select %110, %c23_i32, %c22_i32 : i32
    %c7_i32 = arith.constant 7 : i32
    %118 = vector.broadcast %c7_i32 : i32 to vector<32x1xi32>
    %119 = arith.cmpi sge, %111, %118 : vector<32x1xi32>
    %120 = vector.broadcast %117 : i32 to vector<32x1xi32>
    %121 = arith.cmpi sle, %111, %120 : vector<32x1xi32>
    %122 = arith.andi %119, %121 : vector<32x1xi1>
    %c0_i32_93 = arith.constant 0 : i32
    %123 = vector.broadcast %c0_i32_93 : i32 to vector<32x1xi32>
    %124 = arith.cmpi sge, %116, %123 : vector<32x1xi32>
    %125 = arith.andi %122, %124 : vector<32x1xi1>
    %c32_i32 = arith.constant 32 : i32
    %126 = vector.broadcast %c32_i32 : i32 to vector<32x1xi32>
    %127 = arith.cmpi slt, %116, %126 : vector<32x1xi32>
    %128 = arith.andi %125, %127 : vector<32x1xi1>
    %129 = arith.extui %128 : vector<32x1xi1> to vector<32x1xi32>
    %130 = arith.sitofp %129 : vector<32x1xi32> to vector<32x1xf32>
    %131 = math.absf %7 : vector<16x128xf32>
    %cst_94 = arith.constant dense<0.000000e+00> : vector<128xf32>
    %132 = vector.multi_reduction <add>, %131, %cst_94 [0] : vector<16x128xf32> to vector<128xf32>
    %133 = vector.shape_cast %132 : vector<128xf32> to vector<1x128xf32>
    %134 = math.absf %49 : vector<32x128xf32>
    %135 = vector.broadcast %130 : vector<32x1xf32> to vector<32x128xf32>
    %136 = arith.mulf %134, %135 : vector<32x128xf32>
    %cst_95 = arith.constant dense<0.000000e+00> : vector<128xf32>
    %137 = vector.multi_reduction <add>, %136, %cst_95 [0] : vector<32x128xf32> to vector<128xf32>
    %138 = vector.shape_cast %137 : vector<128xf32> to vector<1x128xf32>
    %139 = math.absf %53 : vector<32x128xf32>
    %140 = vector.broadcast %130 : vector<32x1xf32> to vector<32x128xf32>
    %141 = arith.mulf %139, %140 : vector<32x128xf32>
    %cst_96 = arith.constant dense<0.000000e+00> : vector<128xf32>
    %142 = vector.multi_reduction <add>, %141, %cst_96 [0] : vector<32x128xf32> to vector<128xf32>
    %143 = vector.shape_cast %142 : vector<128xf32> to vector<1x128xf32>
    %144 = vector.broadcast %130 : vector<32x1xf32> to vector<32x128xf32>
    %145 = arith.mulf %109, %144 : vector<32x128xf32>
    %cst_97 = arith.constant dense<0.000000e+00> : vector<128xf32>
    %146 = vector.multi_reduction <add>, %145, %cst_97 [0] : vector<32x128xf32> to vector<128xf32>
    %147 = vector.shape_cast %146 : vector<128xf32> to vector<1x128xf32>
    %c0_98 = arith.constant 0 : index
    %c0_99 = arith.constant 0 : index
    %c0_100 = arith.constant 0 : index
    %148 = vector.load %arg10[%c0_98, %c0_99, %c0_100] : memref<1x4x128xf32, #tpu.memory_space<vmem>>, vector<1x4x128xf32>
    %149 = vector.shape_cast %148 : vector<1x4x128xf32> to vector<4x128xf32>
    %150 = tpu.concatenate %133, %138, %143, %147 in 0 : vector<1x128xf32>, vector<1x128xf32>, vector<1x128xf32>, vector<1x128xf32> -> vector<4x128xf32>
    %151 = arith.addf %149, %150 : vector<4x128xf32>
    %c0_101 = arith.constant 0 : index
    %c0_102 = arith.constant 0 : index
    %c0_103 = arith.constant 0 : index
    %152 = vector.load %arg10[%c0_101, %c0_102, %c0_103] : memref<1x4x128xf32, #tpu.memory_space<vmem>>, vector<1x4x128xf32>
    %153 = vector.shape_cast %152 : vector<1x4x128xf32> to vector<4x128xf32>
    %154 = vector.shape_cast %151 : vector<4x128xf32> to vector<1x4x128xf32>
    tpu.vector_store %arg10[%c0_101, %c0_102, %c0_103], %154 {strides = array<i32>} : memref<1x4x128xf32, #tpu.memory_space<vmem>>, vector<1x4x128xf32>,
    %c0_104 = arith.constant 0 : index
    %c22 = arith.constant 22 : index
    %c0_105 = arith.constant 0 : index
    %155 = vector.load %arg11[%c0_104, %c22, %c0_105] : memref<7x32x128xf32, #tpu.memory_space<vmem>>, vector<1x2x128xf32>
    %156 = vector.shape_cast %155 : vector<1x2x128xf32> to vector<2x128xf32>
    %c0_106 = arith.constant 0 : index
    %c6_107 = arith.constant 6 : index
    %c0_108 = arith.constant 0 : index
    %157 = vector.load %arg11[%c0_106, %c6_107, %c0_108] : memref<7x32x128xf32, #tpu.memory_space<vmem>>, vector<1x2x128xf32>
    %158 = vector.shape_cast %157 : vector<1x2x128xf32> to vector<2x128xf32>
    %159 = vector.shape_cast %156 : vector<2x128xf32> to vector<1x2x128xf32>
    tpu.vector_store %arg11[%c0_106, %c6_107, %c0_108], %159 {strides = array<i32>} : memref<7x32x128xf32, #tpu.memory_space<vmem>>, vector<1x2x128xf32>,
    %c1_109 = arith.constant 1 : index
    %c22_110 = arith.constant 22 : index
    %c0_111 = arith.constant 0 : index
    %160 = vector.load %arg11[%c1_109, %c22_110, %c0_111] : memref<7x32x128xf32, #tpu.memory_space<vmem>>, vector<1x2x128xf32>
    %161 = vector.shape_cast %160 : vector<1x2x128xf32> to vector<2x128xf32>
    %c1_112 = arith.constant 1 : index
    %c6_113 = arith.constant 6 : index
    %c0_114 = arith.constant 0 : index
    %162 = vector.load %arg11[%c1_112, %c6_113, %c0_114] : memref<7x32x128xf32, #tpu.memory_space<vmem>>, vector<1x2x128xf32>
    %163 = vector.shape_cast %162 : vector<1x2x128xf32> to vector<2x128xf32>
    %164 = vector.shape_cast %161 : vector<2x128xf32> to vector<1x2x128xf32>
    tpu.vector_store %arg11[%c1_112, %c6_113, %c0_114], %164 {strides = array<i32>} : memref<7x32x128xf32, #tpu.memory_space<vmem>>, vector<1x2x128xf32>,
    %c2_115 = arith.constant 2 : index
    %c22_116 = arith.constant 22 : index
    %c0_117 = arith.constant 0 : index
    %165 = vector.load %arg11[%c2_115, %c22_116, %c0_117] : memref<7x32x128xf32, #tpu.memory_space<vmem>>, vector<1x2x128xf32>
    %166 = vector.shape_cast %165 : vector<1x2x128xf32> to vector<2x128xf32>
    %c2_118 = arith.constant 2 : index
    %c6_119 = arith.constant 6 : index
    %c0_120 = arith.constant 0 : index
    %167 = vector.load %arg11[%c2_118, %c6_119, %c0_120] : memref<7x32x128xf32, #tpu.memory_space<vmem>>, vector<1x2x128xf32>
    %168 = vector.shape_cast %167 : vector<1x2x128xf32> to vector<2x128xf32>
    %169 = vector.shape_cast %166 : vector<2x128xf32> to vector<1x2x128xf32>
    tpu.vector_store %arg11[%c2_118, %c6_119, %c0_120], %169 {strides = array<i32>} : memref<7x32x128xf32, #tpu.memory_space<vmem>>, vector<1x2x128xf32>,
    %c3_121 = arith.constant 3 : index
    %c22_122 = arith.constant 22 : index
    %c0_123 = arith.constant 0 : index
    %170 = vector.load %arg11[%c3_121, %c22_122, %c0_123] : memref<7x32x128xf32, #tpu.memory_space<vmem>>, vector<1x2x128xf32>
    %171 = vector.shape_cast %170 : vector<1x2x128xf32> to vector<2x128xf32>
    %c3_124 = arith.constant 3 : index
    %c6_125 = arith.constant 6 : index
    %c0_126 = arith.constant 0 : index
    %172 = vector.load %arg11[%c3_124, %c6_125, %c0_126] : memref<7x32x128xf32, #tpu.memory_space<vmem>>, vector<1x2x128xf32>
    %173 = vector.shape_cast %172 : vector<1x2x128xf32> to vector<2x128xf32>
    %174 = vector.shape_cast %171 : vector<2x128xf32> to vector<1x2x128xf32>
    tpu.vector_store %arg11[%c3_124, %c6_125, %c0_126], %174 {strides = array<i32>} : memref<7x32x128xf32, #tpu.memory_space<vmem>>, vector<1x2x128xf32>,
    %c4_127 = arith.constant 4 : index
    %c22_128 = arith.constant 22 : index
    %c0_129 = arith.constant 0 : index
    %175 = vector.load %arg11[%c4_127, %c22_128, %c0_129] : memref<7x32x128xf32, #tpu.memory_space<vmem>>, vector<1x2x128xf32>
    %176 = vector.shape_cast %175 : vector<1x2x128xf32> to vector<2x128xf32>
    %c4_130 = arith.constant 4 : index
    %c6_131 = arith.constant 6 : index
    %c0_132 = arith.constant 0 : index
    %177 = vector.load %arg11[%c4_130, %c6_131, %c0_132] : memref<7x32x128xf32, #tpu.memory_space<vmem>>, vector<1x2x128xf32>
    %178 = vector.shape_cast %177 : vector<1x2x128xf32> to vector<2x128xf32>
    %179 = vector.shape_cast %176 : vector<2x128xf32> to vector<1x2x128xf32>
    tpu.vector_store %arg11[%c4_130, %c6_131, %c0_132], %179 {strides = array<i32>} : memref<7x32x128xf32, #tpu.memory_space<vmem>>, vector<1x2x128xf32>,
    %c5_133 = arith.constant 5 : index
    %c22_134 = arith.constant 22 : index
    %c0_135 = arith.constant 0 : index
    %180 = vector.load %arg11[%c5_133, %c22_134, %c0_135] : memref<7x32x128xf32, #tpu.memory_space<vmem>>, vector<1x2x128xf32>
    %181 = vector.shape_cast %180 : vector<1x2x128xf32> to vector<2x128xf32>
    %c5_136 = arith.constant 5 : index
    %c6_137 = arith.constant 6 : index
    %c0_138 = arith.constant 0 : index
    %182 = vector.load %arg11[%c5_136, %c6_137, %c0_138] : memref<7x32x128xf32, #tpu.memory_space<vmem>>, vector<1x2x128xf32>
    %183 = vector.shape_cast %182 : vector<1x2x128xf32> to vector<2x128xf32>
    %184 = vector.shape_cast %181 : vector<2x128xf32> to vector<1x2x128xf32>
    tpu.vector_store %arg11[%c5_136, %c6_137, %c0_138], %184 {strides = array<i32>} : memref<7x32x128xf32, #tpu.memory_space<vmem>>, vector<1x2x128xf32>,
    %c6_139 = arith.constant 6 : index
    %c22_140 = arith.constant 22 : index
    %c0_141 = arith.constant 0 : index
    %185 = vector.load %arg11[%c6_139, %c22_140, %c0_141] : memref<7x32x128xf32, #tpu.memory_space<vmem>>, vector<1x2x128xf32>
    %186 = vector.shape_cast %185 : vector<1x2x128xf32> to vector<2x128xf32>
    %c6_142 = arith.constant 6 : index
    %c6_143 = arith.constant 6 : index
    %c0_144 = arith.constant 0 : index
    %187 = vector.load %arg11[%c6_142, %c6_143, %c0_144] : memref<7x32x128xf32, #tpu.memory_space<vmem>>, vector<1x2x128xf32>
    %188 = vector.shape_cast %187 : vector<1x2x128xf32> to vector<2x128xf32>
    %189 = vector.shape_cast %186 : vector<2x128xf32> to vector<1x2x128xf32>
    tpu.vector_store %arg11[%c6_142, %c6_143, %c0_144], %189 {strides = array<i32>} : memref<7x32x128xf32, #tpu.memory_space<vmem>>, vector<1x2x128xf32>,
    return
  }
  func.func @transform_0(%arg0: i32, %arg1: i32) -> (i32, i32, i32) {
    %c0_i32 = arith.constant 0 : i32
    %c0_i32_0 = arith.constant 0 : i32
    return %arg0, %arg1, %c0_i32 : i32, i32, i32
  }
  func.func @transform_1(%arg0: i32, %arg1: i32) -> (i32, i32, i32) {
    %c0_i32 = arith.constant 0 : i32
    %c0_i32_0 = arith.constant 0 : i32
    return %arg0, %arg1, %c0_i32 : i32, i32, i32
  }
  func.func @transform_2(%arg0: i32, %arg1: i32) -> (i32, i32) {
    %c0_i32 = arith.constant 0 : i32
    %c0_i32_0 = arith.constant 0 : i32
    %c0_i32_1 = arith.constant 0 : i32
    return %c0_i32, %c0_i32_0 : i32, i32
  }
  func.func @transform_3(%arg0: i32, %arg1: i32) -> (i32, i32) {
    %c0_i32 = arith.constant 0 : i32
    %c0_i32_0 = arith.constant 0 : i32
    %c0_i32_1 = arith.constant 0 : i32
    return %c0_i32, %c0_i32_0 : i32, i32
  }
  func.func @transform_4(%arg0: i32, %arg1: i32) -> (i32, i32) {
    %c0_i32 = arith.constant 0 : i32
    %c0_i32_0 = arith.constant 0 : i32
    %c0_i32_1 = arith.constant 0 : i32
    return %c0_i32, %c0_i32_0 : i32, i32
  }
  func.func @transform_5(%arg0: i32, %arg1: i32) -> (i32, i32) {
    %c0_i32 = arith.constant 0 : i32
    %c0_i32_0 = arith.constant 0 : i32
    %c0_i32_1 = arith.constant 0 : i32
    return %c0_i32, %c0_i32_0 : i32, i32
  }
  func.func @transform_6(%arg0: i32, %arg1: i32) -> (i32, i32) {
    %c0_i32 = arith.constant 0 : i32
    %c0_i32_0 = arith.constant 0 : i32
    %c0_i32_1 = arith.constant 0 : i32
    return %c0_i32, %c0_i32_0 : i32, i32
  }
  func.func @transform_7(%arg0: i32, %arg1: i32) -> (i32, i32) {
    %c0_i32 = arith.constant 0 : i32
    %c0_i32_0 = arith.constant 0 : i32
    %c0_i32_1 = arith.constant 0 : i32
    return %c0_i32, %c0_i32_0 : i32, i32
  }
  func.func @transform_8(%arg0: i32, %arg1: i32) -> (i32, i32, i32) {
    %c0_i32 = arith.constant 0 : i32
    %c0_i32_0 = arith.constant 0 : i32
    %c0_i32_1 = arith.constant 0 : i32
    return %arg0, %c0_i32, %c0_i32_0 : i32, i32, i32
  }
}

</mosaic_0001>

<llo_original>
// kernel: tpu_custom_call.1
$region0: #{tpu_custom_call.1}
  #allocation0 [shape = 'u32[]', space=smem, size = 0x4, offset = 0x4, fixed_abs, tag = 'smem constant byte address 0x4 - core index']
  #allocation1 [shape = 'u32[144,128]{1,0:T(1,128)}', space=vmem, size = 0x12000, scoped, tag = 'internal scratch']
  #allocation2 [shape = 'f32[7,32,128]{2,1,0:T(8,128)}', space=vmem, size = 0x1c000, scoped, tag = 'scratch operand']
  %s0 = inlined_call_operand.hbm [shape: f32[2,32,128], index: 0, kind: input, shape index: {}]
  %s1 = inlined_call_operand.hbm [shape: f32[2,32,128], index: 1, kind: input, shape index: {}]
  %s2 = inlined_call_operand.hbm [shape: f32[128,128], index: 2, kind: input, shape index: {}]
  %s3 = inlined_call_operand.hbm [shape: f32[128,128], index: 3, kind: input, shape index: {}]
  %s4 = inlined_call_operand.hbm [shape: f32[128,128], index: 4, kind: input, shape index: {}]
  %s5 = inlined_call_operand.hbm [shape: f32[32,32], index: 5, kind: input, shape index: {}]
  %s6 = inlined_call_operand.hbm [shape: f32[32,32], index: 6, kind: input, shape index: {}]
  %s7 = inlined_call_operand.hbm [shape: f32[32,32], index: 7, kind: input, shape index: {}]
  %s8 = inlined_call_operand.hbm [shape: f32[2,4,128], index: 8, kind: output, shape index: {}]
  %s9 = sld [smem:[#allocation0]]
  $region101: #{tpu_custom_call.1} parent=0
    _
  %s11 = ssub.s32 1, %s9
  %s12 = scalar_select 0, %s11, %s9
  $region1: #{tpu_custom_call.1} parent=0
    #allocation3 [shape = 'u8[16384]{0}', space=vmem, size = 0x4000, scoped, tag = 'input window, operand 0']
    #allocation4 [shape = 's32[2]{0}', space=sflag, size = 0x8, scoped, tag = 'scoped memory for tpu_custom_call.1']
    #allocation5 [shape = 's32[2]{0}', space=sflag, size = 0x8, scoped, tag = 'scoped memory for tpu_custom_call.1']
    #allocation6 [shape = 'u8[16384]{0}', space=vmem, size = 0x4000, scoped, tag = 'input window, operand 1']
    #allocation7 [shape = 's32[2]{0}', space=sflag, size = 0x8, scoped, tag = 'scoped memory for tpu_custom_call.1']
    #allocation8 [shape = 'u8[65536]{0}', space=vmem, size = 0x10000, scoped, tag = 'input window, operand 2, single buffered']
    #allocation9 [shape = 'u8[65536]{0}', space=vmem, size = 0x10000, scoped, tag = 'input window, operand 3, single buffered']
    #allocation10 [shape = 's32[1]{0}', space=sflag, size = 0x4, scoped, tag = 'scoped memory for tpu_custom_call.1']
    #allocation11 [shape = 'u8[65536]{0}', space=vmem, size = 0x10000, scoped, tag = 'input window, operand 4, single buffered']
    #allocation12 [shape = 'u8[16384]{0}', space=vmem, size = 0x4000, scoped, tag = 'input window, operand 5, single buffered']
    #allocation13 [shape = 's32[1]{0}', space=sflag, size = 0x4, scoped, tag = 'scoped memory for tpu_custom_call.1']
    #allocation14 [shape = 'u8[16384]{0}', space=vmem, size = 0x4000, scoped, tag = 'input window, operand 6, single buffered']
    #allocation15 [shape = 'u8[16384]{0}', space=vmem, size = 0x4000, scoped, tag = 'input window, operand 7, single buffered']
    #allocation16 [shape = 's32[1]{0}', space=sflag, size = 0x4, scoped, tag = 'scoped memory for tpu_custom_call.1']
    #allocation17 [shape = 'u8[4096]{0}', space=vmem, size = 0x1000, scoped, tag = 'output window, operand 0']
    %13 = vsyncpa [#allocation4], 0
    %s14 = scalar_lea.sflag [#allocation4], 1
    %15 = vsyncpa %s14, 0
    %16 = vsyncpa [#allocation7], 0
    %s17 = scalar_lea.sflag [#allocation7], 1
    %18 = vsyncpa %s17, 0
    %19 = vsyncpa [#allocation10], 0
    %20 = vsyncpa [#allocation13], 0
    %21 = vsyncpa [#allocation16], 0
    %22 = vsyncpa [#allocation5], 0
    %s23 = scalar_lea.sflag [#allocation5], 1
    %24 = vsyncpa %s23, 0
    loop: start=0, step=1, limit=6
    $region2: #{tpu_custom_call.1} parent=1 // loop_pre_header
      _
    $region3: #{tpu_custom_call.1} parent=1 // loop_header
      %s26 = sphi 0, %s30
      %p27 = scmp.ge.s32.totalorder %s26, 6
      %s33 = sphi 0, %s45
      %s34 = sphi 0, %s41
      %s35 = sphi 0, %s33
      %s36 = sphi 0, %s34
      %s37 = sphi 0, %s35
      %s38 = sphi 0, %s36
      %s50 = sphi 0, %s52
      %s53 = sphi 0, %s50
      %s54 = sphi 0, %s53
      %s70 = sphi 0, %s54
      %s78 = sphi 0, %s80
      %s81 = sphi 0, %s78
      %s82 = sphi 0, %s81
      %s98 = sphi 0, %s82
      %s102 = sphi 0, %s102
      %s104 = sphi 0, %s102
      %s105 = sphi 0, %s104
      %s119 = sphi 0, %s105
      %s123 = sphi 0, %s123
      %s125 = sphi 0, %s123
      %s126 = sphi 0, %s125
      %s140 = sphi 0, %s126
      %s144 = sphi 0, %s144
      %s146 = sphi 0, %s144
      %s147 = sphi 0, %s146
      %s161 = sphi 0, %s147
      %s165 = sphi 0, %s165
      %s167 = sphi 0, %s165
      %s168 = sphi 0, %s167
      %s182 = sphi 0, %s168
      %s186 = sphi 0, %s186
      %s188 = sphi 0, %s186
      %s189 = sphi 0, %s188
      %s203 = sphi 0, %s189
      %s207 = sphi 0, %s207
      %s209 = sphi 0, %s207
      %s210 = sphi 0, %s209
      %s224 = sphi 0, %s210
      %s230 = sphi 0, %s232
      %s233 = sphi 0, %s230
      %s234 = sphi 0, %s233
      %s250 = sphi 0, %s234
    $region4: #{tpu_custom_call.1} parent=1 // loop_header_branch
      %29 = sbr.rel (%p27) target = $region8
    $region5: #{tpu_custom_call.1} parent=1 // loop_body
      %s31 = ssub.s32 %s26, 1
      %s32 = ssub.s32 %s26, 2
      %s39 = sadd.s32 1, %s34
      %p40 = scmp.ge.s32.totalorder %s39, 2
      %s41 = scalar_select %p40, 0, %s39
      %s42 = sadd.s32 1, %s33
      %s43 = scalar_select %p40, %s42, %s33
      %p44 = scmp.ge.s32.totalorder %s43, 2
      %s45 = scalar_select %p44, 0, %s43
      %s46 = ssub.s32 %s33, %s45
      %s47 = ssub.s32 %s34, %s41
      %s48 = sor.u32 %s46, %s47
      %p49 = scmp.eq.s32.totalorder %s48, 0
      %s51 = sadd.s32 %s50, 1
      %s52 = scalar_select %p49, %s50, %s51
      %p55 = pneg %p49
      %p56 = scmp.eq.s32.totalorder %s26, 3
      %p57 = por %p55, %p56
      %p58 = scmp.ne.s32.totalorder %s50, %s53
      %p59 = scmp.eq.s32.totalorder %s26, 0
      %p60 = por %p58, %p59
      %p61 = scmp.ne.s32.totalorder %s50, %s53
      %p62 = scmp.eq.s32.totalorder %s31, 3
      %p63 = por %p61, %p62
      %p64 = scmp.ne.s32.totalorder %s53, %s54
      %p65 = scmp.eq.s32.totalorder %s31, 0
      %p66 = por %p64, %p65
      %p67 = scmp.ne.s32.totalorder %s53, %s54
      %p68 = scmp.eq.s32.totalorder %s32, 3
      %p69 = por %p67, %p68
      %p71 = scmp.ne.s32.totalorder %s54, %s70
      %p72 = scmp.eq.s32.totalorder %s32, 0
      %p73 = por %p71, %p72
      %s74 = ssub.s32 %s33, %s45
      %s75 = ssub.s32 %s34, %s41
      %s76 = sor.u32 %s74, %s75
      %p77 = scmp.eq.s32.totalorder %s76, 0
      %s79 = sadd.s32 %s78, 1
      %s80 = scalar_select %p77, %s78, %s79
      %p83 = pneg %p77
      %p84 = scmp.eq.s32.totalorder %s26, 3
      %p85 = por %p83, %p84
      %p86 = scmp.ne.s32.totalorder %s78, %s81
      %p87 = scmp.eq.s32.totalorder %s26, 0
      %p88 = por %p86, %p87
      %p89 = scmp.ne.s32.totalorder %s78, %s81
      %p90 = scmp.eq.s32.totalorder %s31, 3
      %p91 = por %p89, %p90
      %p92 = scmp.ne.s32.totalorder %s81, %s82
      %p93 = scmp.eq.s32.totalorder %s31, 0
      %p94 = por %p92, %p93
      %p95 = scmp.ne.s32.totalorder %s81, %s82
      %p96 = scmp.eq.s32.totalorder %s32, 3
      %p97 = por %p95, %p96
      %p99 = scmp.ne.s32.totalorder %s82, %s98
      %p100 = scmp.eq.s32.totalorder %s32, 0
      %p101 = por %p99, %p100
      %s103 = sadd.s32 %s102, 1
      %p106 = scmp.eq.s32.totalorder %s26, 3
      %p107 = scmp.ne.s32.totalorder %s102, %s104
      %p108 = scmp.eq.s32.totalorder %s26, 0
      %p109 = por %p107, %p108
      %p110 = scmp.ne.s32.totalorder %s102, %s104
      %p111 = scmp.eq.s32.totalorder %s31, 3
      %p112 = por %p110, %p111
      %p113 = scmp.ne.s32.totalorder %s104, %s105
      %p114 = scmp.eq.s32.totalorder %s31, 0
      %p115 = por %p113, %p114
      %p116 = scmp.ne.s32.totalorder %s104, %s105
      %p117 = scmp.eq.s32.totalorder %s32, 3
      %p118 = por %p116, %p117
      %p120 = scmp.ne.s32.totalorder %s105, %s119
      %p121 = scmp.eq.s32.totalorder %s32, 0
      %p122 = por %p120, %p121
      %s124 = sadd.s32 %s123, 1
      %p127 = scmp.eq.s32.totalorder %s26, 3
      %p128 = scmp.ne.s32.totalorder %s123, %s125
      %p129 = scmp.eq.s32.totalorder %s26, 0
      %p130 = por %p128, %p129
      %p131 = scmp.ne.s32.totalorder %s123, %s125
      %p132 = scmp.eq.s32.totalorder %s31, 3
      %p133 = por %p131, %p132
      %p134 = scmp.ne.s32.totalorder %s125, %s126
      %p135 = scmp.eq.s32.totalorder %s31, 0
      %p136 = por %p134, %p135
      %p137 = scmp.ne.s32.totalorder %s125, %s126
      %p138 = scmp.eq.s32.totalorder %s32, 3
      %p139 = por %p137, %p138
      %p141 = scmp.ne.s32.totalorder %s126, %s140
      %p142 = scmp.eq.s32.totalorder %s32, 0
      %p143 = por %p141, %p142
      %s145 = sadd.s32 %s144, 1
      %p148 = scmp.eq.s32.totalorder %s26, 3
      %p149 = scmp.ne.s32.totalorder %s144, %s146
      %p150 = scmp.eq.s32.totalorder %s26, 0
      %p151 = por %p149, %p150
      %p152 = scmp.ne.s32.totalorder %s144, %s146
      %p153 = scmp.eq.s32.totalorder %s31, 3
      %p154 = por %p152, %p153
      %p155 = scmp.ne.s32.totalorder %s146, %s147
      %p156 = scmp.eq.s32.totalorder %s31, 0
      %p157 = por %p155, %p156
      %p158 = scmp.ne.s32.totalorder %s146, %s147
      %p159 = scmp.eq.s32.totalorder %s32, 3
      %p160 = por %p158, %p159
      %p162 = scmp.ne.s32.totalorder %s147, %s161
      %p163 = scmp.eq.s32.totalorder %s32, 0
      %p164 = por %p162, %p163
      %s166 = sadd.s32 %s165, 1
      %p169 = scmp.eq.s32.totalorder %s26, 3
      %p170 = scmp.ne.s32.totalorder %s165, %s167
      %p171 = scmp.eq.s32.totalorder %s26, 0
      %p172 = por %p170, %p171
      %p173 = scmp.ne.s32.totalorder %s165, %s167
      %p174 = scmp.eq.s32.totalorder %s31, 3
      %p175 = por %p173, %p174
      %p176 = scmp.ne.s32.totalorder %s167, %s168
      %p177 = scmp.eq.s32.totalorder %s31, 0
      %p178 = por %p176, %p177
      %p179 = scmp.ne.s32.totalorder %s167, %s168
      %p180 = scmp.eq.s32.totalorder %s32, 3
      %p181 = por %p179, %p180
      %p183 = scmp.ne.s32.totalorder %s168, %s182
      %p184 = scmp.eq.s32.totalorder %s32, 0
      %p185 = por %p183, %p184
      %s187 = sadd.s32 %s186, 1
      %p190 = scmp.eq.s32.totalorder %s26, 3
      %p191 = scmp.ne.s32.totalorder %s186, %s188
      %p192 = scmp.eq.s32.totalorder %s26, 0
      %p193 = por %p191, %p192
      %p194 = scmp.ne.s32.totalorder %s186, %s188
      %p195 = scmp.eq.s32.totalorder %s31, 3
      %p196 = por %p194, %p195
      %p197 = scmp.ne.s32.totalorder %s188, %s189
      %p198 = scmp.eq.s32.totalorder %s31, 0
      %p199 = por %p197, %p198
      %p200 = scmp.ne.s32.totalorder %s188, %s189
      %p201 = scmp.eq.s32.totalorder %s32, 3
      %p202 = por %p200, %p201
      %p204 = scmp.ne.s32.totalorder %s189, %s203
      %p205 = scmp.eq.s32.totalorder %s32, 0
      %p206 = por %p204, %p205
      %s208 = sadd.s32 %s207, 1
      %p211 = scmp.eq.s32.totalorder %s26, 3
      %p212 = scmp.ne.s32.totalorder %s207, %s209
      %p213 = scmp.eq.s32.totalorder %s26, 0
      %p214 = por %p212, %p213
      %p215 = scmp.ne.s32.totalorder %s207, %s209
      %p216 = scmp.eq.s32.totalorder %s31, 3
      %p217 = por %p215, %p216
      %p218 = scmp.ne.s32.totalorder %s209, %s210
      %p219 = scmp.eq.s32.totalorder %s31, 0
      %p220 = por %p218, %p219
      %p221 = scmp.ne.s32.totalorder %s209, %s210
      %p222 = scmp.eq.s32.totalorder %s32, 3
      %p223 = por %p221, %p222
      %p225 = scmp.ne.s32.totalorder %s210, %s224
      %p226 = scmp.eq.s32.totalorder %s32, 0
      %p227 = por %p225, %p226
      %s228 = ssub.s32 %s33, %s45
      %p229 = scmp.eq.s32.totalorder %s228, 0
      %s231 = sadd.s32 %s230, 1
      %s232 = scalar_select %p229, %s230, %s231
      %p235 = pneg %p229
      %p236 = scmp.eq.s32.totalorder %s26, 3
      %p237 = por %p235, %p236
      %p238 = scmp.ne.s32.totalorder %s230, %s233
      %p239 = scmp.eq.s32.totalorder %s26, 0
      %p240 = por %p238, %p239
      %p241 = scmp.ne.s32.totalorder %s230, %s233
      %p242 = scmp.eq.s32.totalorder %s31, 3
      %p243 = por %p241, %p242
      %p244 = scmp.ne.s32.totalorder %s233, %s234
      %p245 = scmp.eq.s32.totalorder %s31, 0
      %p246 = por %p244, %p245
      %p247 = scmp.ne.s32.totalorder %s233, %s234
      %p248 = scmp.eq.s32.totalorder %s32, 3
      %p249 = por %p247, %p248
      %p251 = scmp.ne.s32.totalorder %s234, %s250
      %p252 = scmp.eq.s32.totalorder %s32, 0
      %p253 = por %p251, %p252
      %p254 = scmp.le.s32.totalorder 1, %s26
      %p255 = scmp.lt.s32.totalorder %s26, 5
      %p256 = pnand %p254, %p255
      %p257 = pneg %p256
      // Predicated region
      $region9: #{tpu_custom_call.1} parent=5 // pred_check
        _
      $region10: #{tpu_custom_call.1} parent=5 // pred_check_branch
        %259 = sbr.rel (%p256) target = $region12
      $region11: #{tpu_custom_call.1} parent=5 // pred_region
        %s260 = ssub.s32 %s26, 1
        // Predicated region
        $region13: #{tpu_custom_call.1} parent=11 // pred_check
          %p261 = pneg %p115
        $region14: #{tpu_custom_call.1} parent=11 // pred_check_branch
          %263 = sbr.rel (%p261) target = $region16
        $region15: #{tpu_custom_call.1} parent=11 // pred_region
          %s265 = ssub.s32 2048, 2048
          %266 = vsyncadd [#allocation7], %s265
          %s267 = sshll.u32 [#allocation8], 4
          %s268 = int_to_ptr.vmem [resolvable:$true] %s267
          %273 = dma.hbm_to_vmem [thread:$0]  %s2, 2048, %s268, [#allocation7], 128, 128, 8
        $region16: #{tpu_custom_call.1} parent=11 // pred_fallthru
          _
        // Predicated region
        $region17: #{tpu_custom_call.1} parent=11 // pred_check
          %p274 = pneg %p136
        $region18: #{tpu_custom_call.1} parent=11 // pred_check_branch
          %276 = sbr.rel (%p274) target = $region20
        $region19: #{tpu_custom_call.1} parent=11 // pred_region
          %s278 = ssub.s32 2048, 2048
          %279 = vsyncadd [#allocation10], %s278
          %s280 = sshll.u32 [#allocation9], 4
          %s281 = int_to_ptr.vmem [resolvable:$true] %s280
          %286 = dma.hbm_to_vmem [thread:$0]  %s3, 2048, %s281, [#allocation10], 128, 128, 8
        $region20: #{tpu_custom_call.1} parent=11 // pred_fallthru
          _
        // Predicated region
        $region21: #{tpu_custom_call.1} parent=11 // pred_check
          %p287 = pneg %p157
        $region22: #{tpu_custom_call.1} parent=11 // pred_check_branch
          %289 = sbr.rel (%p287) target = $region24
        $region23: #{tpu_custom_call.1} parent=11 // pred_region
          %s291 = ssub.s32 2048, 2048
          %292 = vsyncadd [#allocation10], %s291
          %s293 = sshll.u32 [#allocation11], 4
          %s294 = int_to_ptr.vmem [resolvable:$true] %s293
          %299 = dma.hbm_to_vmem [thread:$0]  %s4, 2048, %s294, [#allocation10], 128, 128, 8
        $region24: #{tpu_custom_call.1} parent=11 // pred_fallthru
          _
        // Predicated region
        $region25: #{tpu_custom_call.1} parent=11 // pred_check
          %p300 = pneg %p178
        $region26: #{tpu_custom_call.1} parent=11 // pred_check_branch
          %302 = sbr.rel (%p300) target = $region28
        $region27: #{tpu_custom_call.1} parent=11 // pred_region
          %s304 = ssub.s32 512, 512
          %305 = vsyncadd [#allocation13], %s304
          %s306 = sshll.u32 [#allocation12], 4
          %s307 = int_to_ptr.vmem [resolvable:$true] %s306
          %312 = dma.hbm_to_vmem [thread:$0]  %s5, 512, %s307, [#allocation13], 128, 128, 8
        $region28: #{tpu_custom_call.1} parent=11 // pred_fallthru
          _
        // Predicated region
        $region29: #{tpu_custom_call.1} parent=11 // pred_check
          %p313 = pneg %p199
        $region30: #{tpu_custom_call.1} parent=11 // pred_check_branch
          %315 = sbr.rel (%p313) target = $region32
        $region31: #{tpu_custom_call.1} parent=11 // pred_region
          %s317 = ssub.s32 512, 512
          %318 = vsyncadd [#allocation13], %s317
          %s319 = sshll.u32 [#allocation14], 4
          %s320 = int_to_ptr.vmem [resolvable:$true] %s319
          %325 = dma.hbm_to_vmem [thread:$0]  %s6, 512, %s320, [#allocation13], 128, 128, 8
        $region32: #{tpu_custom_call.1} parent=11 // pred_fallthru
          _
        // Predicated region
        $region33: #{tpu_custom_call.1} parent=11 // pred_check
          %p326 = pneg %p220
        $region34: #{tpu_custom_call.1} parent=11 // pred_check_branch
          %328 = sbr.rel (%p326) target = $region36
        $region35: #{tpu_custom_call.1} parent=11 // pred_region
          %s330 = ssub.s32 512, 512
          %331 = vsyncadd [#allocation16], %s330
          %s332 = sshll.u32 [#allocation15], 4
          %s333 = int_to_ptr.vmem [resolvable:$true] %s332
          %338 = dma.hbm_to_vmem [thread:$0]  %s7, 512, %s333, [#allocation16], 128, 128, 8
        $region36: #{tpu_custom_call.1} parent=11 // pred_fallthru
          _
      $region12: #{tpu_custom_call.1} parent=5 // pred_fallthru
        _
      %p339 = scmp.lt.s32.totalorder %s26, 4
      // Predicated region
      $region37: #{tpu_custom_call.1} parent=5 // pred_check
        %p340 = pneg %p339
      $region38: #{tpu_custom_call.1} parent=5 // pred_check_branch
        %342 = sbr.rel (%p340) target = $region40
      $region39: #{tpu_custom_call.1} parent=5 // pred_region
        // Predicated region
        $region41: #{tpu_custom_call.1} parent=39 // pred_check
          %p343 = pneg %p60
        $region42: #{tpu_custom_call.1} parent=39 // pred_check_branch
          %345 = sbr.rel (%p343) target = $region44
        $region43: #{tpu_custom_call.1} parent=39 // pred_region
          %s346 = sand.u32 %s50, 1
          %s347 = scalar_lea.sflag [#allocation4], %s346
          %s348 = sand.u32 %s50, 1
          %s349 = smul.addr %s348, 16
          %s350 = scalar_lea.vmem [#allocation3], %s349
          %s351 = smul.u32 2, %s34
          %s353 = ssub.s32 256, 256
          %354 = vsyncadd %s347, %s353
          %s355 = smul.addr %s33, 4
          %s356 = sadd.s32 %s351, %s355
          %s357 = smul.addr %s356, 128
          %s358 = scalar_lea.hbm %s0, %s357
          %s359 = sshll.u32 %s350, 4
          %s360 = int_to_ptr.vmem [resolvable:$true] %s359
          %365 = dma.hbm_to_vmem [thread:$0]  %s358, 256, %s360, %s347, 128, 128, 8
        $region44: #{tpu_custom_call.1} parent=39 // pred_fallthru
          _
        // Predicated region
        $region45: #{tpu_custom_call.1} parent=39 // pred_check
          %p366 = pneg %p88
        $region46: #{tpu_custom_call.1} parent=39 // pred_check_branch
          %368 = sbr.rel (%p366) target = $region48
        $region47: #{tpu_custom_call.1} parent=39 // pred_region
          %s369 = sand.u32 %s26, 1
          %s370 = scalar_lea.sflag [#allocation7], %s369
          %s371 = sand.u32 %s78, 1
          %s372 = smul.addr %s371, 16
          %s373 = scalar_lea.vmem [#allocation6], %s372
          %s374 = smul.u32 2, %s34
          %s376 = ssub.s32 256, 256
          %377 = vsyncadd %s370, %s376
          %s378 = smul.addr %s33, 4
          %s379 = sadd.s32 %s374, %s378
          %s380 = smul.addr %s379, 128
          %s381 = scalar_lea.hbm %s1, %s380
          %s382 = sshll.u32 %s373, 4
          %s383 = int_to_ptr.vmem [resolvable:$true] %s382
          %388 = dma.hbm_to_vmem [thread:$0]  %s381, 256, %s383, %s370, 128, 128, 8
        $region48: #{tpu_custom_call.1} parent=39 // pred_fallthru
          _
      $region40: #{tpu_custom_call.1} parent=5 // pred_fallthru
        _
      %p389 = scmp.le.s32.totalorder 1, %s26
      %p390 = scmp.lt.s32.totalorder %s26, 5
      %p391 = pnand %p389, %p390
      %p392 = pneg %p391
      // Predicated region
      $region49: #{tpu_custom_call.1} parent=5 // pred_check
        _
      $region50: #{tpu_custom_call.1} parent=5 // pred_check_branch
        %394 = sbr.rel (%p391) target = $region52
      $region51: #{tpu_custom_call.1} parent=5 // pred_region
        %s395 = ssub.s32 %s26, 1
        %s396 = sand.u32 %s53, 1
        %s397 = scalar_lea.sflag [#allocation4], %s396
        %s398 = sand.u32 %s53, 1
        %s399 = smul.addr %s398, 16
        %s400 = scalar_lea.vmem [#allocation3], %s399
        // Predicated region
        $region53: #{tpu_custom_call.1} parent=51 // pred_check
          %p401 = pneg %p66
        $region54: #{tpu_custom_call.1} parent=51 // pred_check_branch
          %403 = sbr.rel (%p401) target = $region56
        $region55: #{tpu_custom_call.1} parent=51 // pred_region
          %404 = dma.done %s397, 256
        $region56: #{tpu_custom_call.1} parent=51 // pred_fallthru
          _
        %s405 = sand.u32 %s31, 1
        %s406 = scalar_lea.sflag [#allocation7], %s405
        %s407 = sand.u32 %s81, 1
        %s408 = smul.addr %s407, 16
        %s409 = scalar_lea.vmem [#allocation6], %s408
        // Predicated region
        $region57: #{tpu_custom_call.1} parent=51 // pred_check
          %p410 = pneg %p94
        $region58: #{tpu_custom_call.1} parent=51 // pred_check_branch
          %412 = sbr.rel (%p410) target = $region60
        $region59: #{tpu_custom_call.1} parent=51 // pred_region
          %413 = dma.done %s406, 256
        $region60: #{tpu_custom_call.1} parent=51 // pred_fallthru
          _
        // Predicated region
        $region61: #{tpu_custom_call.1} parent=51 // pred_check
          %p414 = pneg %p115
        $region62: #{tpu_custom_call.1} parent=51 // pred_check_branch
          %416 = sbr.rel (%p414) target = $region64
        $region63: #{tpu_custom_call.1} parent=51 // pred_region
          %417 = dma.done [#allocation7], 2048
        $region64: #{tpu_custom_call.1} parent=51 // pred_fallthru
          _
        // Predicated region
        $region65: #{tpu_custom_call.1} parent=51 // pred_check
          %p418 = pneg %p136
        $region66: #{tpu_custom_call.1} parent=51 // pred_check_branch
          %420 = sbr.rel (%p418) target = $region68
        $region67: #{tpu_custom_call.1} parent=51 // pred_region
          %421 = dma.done [#allocation10], 2048
        $region68: #{tpu_custom_call.1} parent=51 // pred_fallthru
          _
        // Predicated region
        $region69: #{tpu_custom_call.1} parent=51 // pred_check
          %p422 = pneg %p157
        $region70: #{tpu_custom_call.1} parent=51 // pred_check_branch
          %424 = sbr.rel (%p422) target = $region72
        $region71: #{tpu_custom_call.1} parent=51 // pred_region
          %425 = dma.done [#allocation10], 2048
        $region72: #{tpu_custom_call.1} parent=51 // pred_fallthru
          _
        // Predicated region
        $region73: #{tpu_custom_call.1} parent=51 // pred_check
          %p426 = pneg %p178
        $region74: #{tpu_custom_call.1} parent=51 // pred_check_branch
          %428 = sbr.rel (%p426) target = $region76
        $region75: #{tpu_custom_call.1} parent=51 // pred_region
          %429 = dma.done [#allocation13], 512
        $region76: #{tpu_custom_call.1} parent=51 // pred_fallthru
          _
        // Predicated region
        $region77: #{tpu_custom_call.1} parent=51 // pred_check
          %p430 = pneg %p199
        $region78: #{tpu_custom_call.1} parent=51 // pred_check_branch
          %432 = sbr.rel (%p430) target = $region80
        $region79: #{tpu_custom_call.1} parent=51 // pred_region
          %433 = dma.done [#allocation13], 512
        $region80: #{tpu_custom_call.1} parent=51 // pred_fallthru
          _
        // Predicated region
        $region81: #{tpu_custom_call.1} parent=51 // pred_check
          %p434 = pneg %p220
        $region82: #{tpu_custom_call.1} parent=51 // pred_check_branch
          %436 = sbr.rel (%p434) target = $region84
        $region83: #{tpu_custom_call.1} parent=51 // pred_region
          %437 = dma.done [#allocation16], 512
        $region84: #{tpu_custom_call.1} parent=51 // pred_fallthru
          _
        %s438 = sand.u32 %s53, 1
        %s439 = scalar_lea.sflag [#allocation4], %s438
        %s440 = sand.u32 %s53, 1
        %s441 = smul.addr %s440, 16
        %s442 = scalar_lea.vmem [#allocation3], %s441
        %p443 = pneg %p66
        %p444 = pneg %p63
        %s445 = sand.u32 %s31, 1
        %s446 = scalar_lea.sflag [#allocation7], %s445
        %s447 = sand.u32 %s81, 1
        %s448 = smul.addr %s447, 16
        %s449 = scalar_lea.vmem [#allocation6], %s448
        %p450 = pneg %p94
        %p451 = pneg %p91
        %p452 = pneg %p115
        %p453 = pneg %p112
        %p454 = pneg %p136
        %p455 = pneg %p133
        %p456 = pneg %p157
        %p457 = pneg %p154
        %p458 = pneg %p178
        %p459 = pneg %p175
        %p460 = pneg %p199
        %p461 = pneg %p196
        %p462 = pneg %p220
        %p463 = pneg %p217
        %p464 = pneg %p246
        %p465 = pneg %p243
        %s466 = sand.u32 %s233, 1
        %s467 = scalar_lea.sflag [#allocation5], %s466
        %s468 = sand.u32 %s233, 1
        %s469 = smul.addr %s468, 4
        %s470 = scalar_lea.vmem [#allocation17], %s469
        %s471 = smul.u32 2, %s36
        %s472 = smul.u32 2, %s36
        %p473 = scmp.eq.s32.totalorder %s36, 0
        // Predicated region
        $region85: #{tpu_custom_call.1} parent=51 // pred_check
          %p474 = pneg %p473
        $region86: #{tpu_custom_call.1} parent=51 // pred_check_branch
          %476 = sbr.rel (%p474) target = $region88
        $region87: #{tpu_custom_call.1} parent=51 // pred_region
          %477 = vst [vmem:[%s470] sm:$0xf] 0.0
          %478 = vst [vmem:[#allocation2] sm:$0xff] 0.0
          %479 = vst [vmem:[#allocation2 + $0x8] sm:$0xff] 0.0
          %480 = vst [vmem:[#allocation2 + $0x10] sm:$0xff] 0.0
          %481 = vst [vmem:[#allocation2 + $0x18] sm:$0xff] 0.0
          %482 = vst [vmem:[#allocation2 + $0x20] sm:$0xff] 0.0
          %483 = vst [vmem:[#allocation2 + $0x28] sm:$0xff] 0.0
          %484 = vst [vmem:[#allocation2 + $0x30] sm:$0xff] 0.0
          %485 = vst [vmem:[#allocation2 + $0x38] sm:$0xff] 0.0
          %486 = vst [vmem:[#allocation2 + $0x40] sm:$0xff] 0.0
          %487 = vst [vmem:[#allocation2 + $0x48] sm:$0xff] 0.0
          %488 = vst [vmem:[#allocation2 + $0x50] sm:$0xff] 0.0
          %489 = vst [vmem:[#allocation2 + $0x58] sm:$0xff] 0.0
          %490 = vst [vmem:[#allocation2 + $0x60] sm:$0xff] 0.0
          %491 = vst [vmem:[#allocation2 + $0x68] sm:$0xff] 0.0
          %492 = vst [vmem:[#allocation2 + $0x70] sm:$0xff] 0.0
          %493 = vst [vmem:[#allocation2 + $0x78] sm:$0xff] 0.0
          %494 = vst [vmem:[#allocation2 + $0x80] sm:$0xff] 0.0
          %495 = vst [vmem:[#allocation2 + $0x88] sm:$0xff] 0.0
          %496 = vst [vmem:[#allocation2 + $0x90] sm:$0xff] 0.0
          %497 = vst [vmem:[#allocation2 + $0x98] sm:$0xff] 0.0
          %498 = vst [vmem:[#allocation2 + $0xa0] sm:$0xff] 0.0
          %499 = vst [vmem:[#allocation2 + $0xa8] sm:$0xff] 0.0
          %500 = vst [vmem:[#allocation2 + $0xb0] sm:$0xff] 0.0
          %501 = vst [vmem:[#allocation2 + $0xb8] sm:$0xff] 0.0
          %502 = vst [vmem:[#allocation2 + $0xc0] sm:$0xff] 0.0
          %503 = vst [vmem:[#allocation2 + $0xc8] sm:$0xff] 0.0
          %504 = vst [vmem:[#allocation2 + $0xd0] sm:$0xff] 0.0
          %505 = vst [vmem:[#allocation2 + $0xd8] sm:$0xff] 0.0
        $region88: #{tpu_custom_call.1} parent=51 // pred_fallthru
          _
        %v506 = vld [vmem:[%s400] sm:$0xff]
        %v507 = vld [vmem:[%s400 + $0x8] sm:$0xff]
        %v508 = vld [vmem:[%s409] sm:$0xff]
        %v509 = vld [vmem:[%s409 + $0x8] sm:$0xff]
        %v510 = vsub.f32 %v506, %v508
        %v511 = vsub.f32 %v507, %v509
        %v512 = vld [vmem:[#allocation9] sm:$0xff]
        %v513 = vld [vmem:[#allocation9 + $0x8] sm:$0xff]
        %v514 = vld [vmem:[#allocation9 + $0x10] sm:$0xff]
        %v515 = vld [vmem:[#allocation9 + $0x18] sm:$0xff]
        %v516 = vld [vmem:[#allocation9 + $0x20] sm:$0xff]
        %v517 = vld [vmem:[#allocation9 + $0x28] sm:$0xff]
        %v518 = vld [vmem:[#allocation9 + $0x30] sm:$0xff]
        %v519 = vld [vmem:[#allocation9 + $0x38] sm:$0xff]
        %v520 = vld [vmem:[#allocation9 + $0x40] sm:$0xff]
        %v521 = vld [vmem:[#allocation9 + $0x48] sm:$0xff]
        %v522 = vld [vmem:[#allocation9 + $0x50] sm:$0xff]
        %v523 = vld [vmem:[#allocation9 + $0x58] sm:$0xff]
        %v524 = vld [vmem:[#allocation9 + $0x60] sm:$0xff]
        %v525 = vld [vmem:[#allocation9 + $0x68] sm:$0xff]
        %v526 = vld [vmem:[#allocation9 + $0x70] sm:$0xff]
        %v527 = vld [vmem:[#allocation9 + $0x78] sm:$0xff]
        %528 = vmatprep.subr.mxu0 0.0
        %529 = vmatpush1.msra.mxu0 %v512
        %530 = vmatprep.subr.mxu0 0.0
        %531 = vmatpush1.msra.mxu0 %v513
        %532 = vmatprep.subr.mxu0 0.0
        %533 = vmatpush1.msra.mxu0 %v514
        %534 = vmatprep.subr.mxu0 0.0
        %535 = vmatpush1.msra.mxu0 %v515
        %536 = vmatprep.subr.mxu0 0.0
        %537 = vmatpush1.msra.mxu0 %v516
        %538 = vmatprep.subr.mxu0 0.0
        %539 = vmatpush1.msra.mxu0 %v517
        %540 = vmatprep.subr.mxu0 0.0
        %541 = vmatpush1.msra.mxu0 %v518
        %542 = vmatprep.subr.mxu0 0.0
        %543 = vmatpush1.msra.mxu0 %v519
        %544 = vmatprep.subr.mxu0 0.0
        %545 = vmatpush1.msra.mxu0 %v520
        %546 = vmatprep.subr.mxu0 0.0
        %547 = vmatpush1.msra.mxu0 %v521
        %548 = vmatprep.subr.mxu0 0.0
        %549 = vmatpush1.msra.mxu0 %v522
        %550 = vmatprep.subr.mxu0 0.0
        %551 = vmatpush1.msra.mxu0 %v523
        %552 = vmatprep.subr.mxu0 0.0
        %553 = vmatpush1.msra.mxu0 %v524
        %554 = vmatprep.subr.mxu0 0.0
        %555 = vmatpush1.msra.mxu0 %v525
        %556 = vmatprep.subr.mxu0 0.0
        %557 = vmatpush1.msra.mxu0 %v526
        %558 = vmatprep.subr.mxu0 0.0
        %559 = vmatpush1.msra.mxu0 %v527
        %560 = vmatprep.subr.mxu0 0.0
        %561 = vmatpush1.msra.mxu0 0.0
        %562 = vmatprep.subr.mxu0 0.0
        %563 = vmatpush1.msra.mxu0 0.0
        %564 = vmatprep.subr.mxu0 0.0
        %565 = vmatpush1.msra.mxu0 0.0
        %566 = vmatprep.subr.mxu0 0.0
        %567 = vmatpush1.msra.mxu0 0.0
        %568 = vmatprep.subr.mxu0 0.0
        %569 = vmatpush1.msra.mxu0 0.0
        %570 = vmatprep.subr.mxu0 0.0
        %571 = vmatpush1.msra.mxu0 0.0
        %572 = vmatprep.subr.mxu0 0.0
        %573 = vmatpush1.msra.mxu0 0.0
        %574 = vmatprep.subr.mxu0 0.0
        %575 = vmatpush1.msra.mxu0 0.0
        %576 = vmatprep.subr.mxu0 0.0
        %577 = vmatpush1.msra.mxu0 0.0
        %578 = vmatprep.subr.mxu0 0.0
        %579 = vmatpush1.msra.mxu0 0.0
        %580 = vmatprep.subr.mxu0 0.0
        %581 = vmatpush1.msra.mxu0 0.0
        %582 = vmatprep.subr.mxu0 0.0
        %583 = vmatpush1.msra.mxu0 0.0
        %584 = vmatprep.subr.mxu0 0.0
        %585 = vmatpush1.msra.mxu0 0.0
        %586 = vmatprep.subr.mxu0 0.0
        %587 = vmatpush1.msra.mxu0 0.0
        %588 = vmatprep.subr.mxu0 0.0
        %589 = vmatpush1.msra.mxu0 0.0
        %590 = vmatprep.subr.mxu0 0.0
        %591 = vmatpush1.msra.mxu0 0.0
        %592 = vmatprep.mubr.f32.mxu0 0.0
        %593 = vmatmul.mubr.f32.gmra.mrb[0].mxu0 %v510
        %v594 = vpop.f32.mrb[0].mxu0
        %v595 = vadd.f32 0.0, %v594
        %v596 = vpop.f32.mrb[0].mxu0
        %597 = vmatprep.mubr.f32.mxu0 0.0
        %598 = vmatmul.mubr.f32.gmra.mrb[0].mxu0 %v511
        %v599 = vpop.f32.mrb[0].mxu0
        %v600 = vadd.f32 0.0, %v599
        %v601 = vpop.f32.mrb[0].mxu0
        %602 = vdwg.mxu0
        %603 = vst [vmem:[#allocation2 + $0x8] sm:$0xff] %v595
        %604 = vst [vmem:[#allocation2 + $0x10] sm:$0xff] %v600
        %v605 = vld [vmem:[#allocation11] sm:$0xff]
        %v606 = vld [vmem:[#allocation11 + $0x8] sm:$0xff]
        %v607 = vld [vmem:[#allocation11 + $0x10] sm:$0xff]
        %v608 = vld [vmem:[#allocation11 + $0x18] sm:$0xff]
        %v609 = vld [vmem:[#allocation11 + $0x20] sm:$0xff]
        %v610 = vld [vmem:[#allocation11 + $0x28] sm:$0xff]
        %v611 = vld [vmem:[#allocation11 + $0x30] sm:$0xff]
        %v612 = vld [vmem:[#allocation11 + $0x38] sm:$0xff]
        %v613 = vld [vmem:[#allocation11 + $0x40] sm:$0xff]
        %v614 = vld [vmem:[#allocation11 + $0x48] sm:$0xff]
        %v615 = vld [vmem:[#allocation11 + $0x50] sm:$0xff]
        %v616 = vld [vmem:[#allocation11 + $0x58] sm:$0xff]
        %v617 = vld [vmem:[#allocation11 + $0x60] sm:$0xff]
        %v618 = vld [vmem:[#allocation11 + $0x68] sm:$0xff]
        %v619 = vld [vmem:[#allocation11 + $0x70] sm:$0xff]
        %v620 = vld [vmem:[#allocation11 + $0x78] sm:$0xff]
        %621 = vmatprep.subr.mxu0 0.0
        %622 = vmatpush1.msra.mxu0 %v605
        %623 = vmatprep.subr.mxu0 0.0
        %624 = vmatpush1.msra.mxu0 %v606
        %625 = vmatprep.subr.mxu0 0.0
        %626 = vmatpush1.msra.mxu0 %v607
        %627 = vmatprep.subr.mxu0 0.0
        %628 = vmatpush1.msra.mxu0 %v608
        %629 = vmatprep.subr.mxu0 0.0
        %630 = vmatpush1.msra.mxu0 %v609
        %631 = vmatprep.subr.mxu0 0.0
        %632 = vmatpush1.msra.mxu0 %v610
        %633 = vmatprep.subr.mxu0 0.0
        %634 = vmatpush1.msra.mxu0 %v611
        %635 = vmatprep.subr.mxu0 0.0
        %636 = vmatpush1.msra.mxu0 %v612
        %637 = vmatprep.subr.mxu0 0.0
        %638 = vmatpush1.msra.mxu0 %v613
        %639 = vmatprep.subr.mxu0 0.0
        %640 = vmatpush1.msra.mxu0 %v614
        %641 = vmatprep.subr.mxu0 0.0
        %642 = vmatpush1.msra.mxu0 %v615
        %643 = vmatprep.subr.mxu0 0.0
        %644 = vmatpush1.msra.mxu0 %v616
        %645 = vmatprep.subr.mxu0 0.0
        %646 = vmatpush1.msra.mxu0 %v617
        %647 = vmatprep.subr.mxu0 0.0
        %648 = vmatpush1.msra.mxu0 %v618
        %649 = vmatprep.subr.mxu0 0.0
        %650 = vmatpush1.msra.mxu0 %v619
        %651 = vmatprep.subr.mxu0 0.0
        %652 = vmatpush1.msra.mxu0 %v620
        %653 = vmatprep.subr.mxu0 0.0
        %654 = vmatpush1.msra.mxu0 0.0
        %655 = vmatprep.subr.mxu0 0.0
        %656 = vmatpush1.msra.mxu0 0.0
        %657 = vmatprep.subr.mxu0 0.0
        %658 = vmatpush1.msra.mxu0 0.0
        %659 = vmatprep.subr.mxu0 0.0
        %660 = vmatpush1.msra.mxu0 0.0
        %661 = vmatprep.subr.mxu0 0.0
        %662 = vmatpush1.msra.mxu0 0.0
        %663 = vmatprep.subr.mxu0 0.0
        %664 = vmatpush1.msra.mxu0 0.0
        %665 = vmatprep.subr.mxu0 0.0
        %666 = vmatpush1.msra.mxu0 0.0
        %667 = vmatprep.subr.mxu0 0.0
        %668 = vmatpush1.msra.mxu0 0.0
        %669 = vmatprep.subr.mxu0 0.0
        %670 = vmatpush1.msra.mxu0 0.0
        %671 = vmatprep.subr.mxu0 0.0
        %672 = vmatpush1.msra.mxu0 0.0
        %673 = vmatprep.subr.mxu0 0.0
        %674 = vmatpush1.msra.mxu0 0.0
        %675 = vmatprep.subr.mxu0 0.0
        %676 = vmatpush1.msra.mxu0 0.0
        %677 = vmatprep.subr.mxu0 0.0
        %678 = vmatpush1.msra.mxu0 0.0
        %679 = vmatprep.subr.mxu0 0.0
        %680 = vmatpush1.msra.mxu0 0.0
        %681 = vmatprep.subr.mxu0 0.0
        %682 = vmatpush1.msra.mxu0 0.0
        %683 = vmatprep.subr.mxu0 0.0
        %684 = vmatpush1.msra.mxu0 0.0
        %685 = vmatprep.mubr.f32.mxu0 0.0
        %686 = vmatmul.mubr.f32.gmra.mrb[0].mxu0 %v510
        %v687 = vpop.f32.mrb[0].mxu0
        %v688 = vadd.f32 0.0, %v687
        %v689 = vpop.f32.mrb[0].mxu0
        %690 = vmatprep.mubr.f32.mxu0 0.0
        %691 = vmatmul.mubr.f32.gmra.mrb[0].mxu0 %v511
        %v692 = vpop.f32.mrb[0].mxu0
        %v693 = vadd.f32 0.0, %v692
        %v694 = vpop.f32.mrb[0].mxu0
        %695 = vdwg.mxu0
        %s696 = scalar_lea.vmem [#allocation2], 32
        %697 = vst [vmem:[%s696 + $0x8] sm:$0xff] %v688
        %698 = vst [vmem:[%s696 + $0x10] sm:$0xff] %v693
        %v699 = vld [vmem:[#allocation8] sm:$0xff]
        %v700 = vld [vmem:[#allocation8 + $0x8] sm:$0xff]
        %v701 = vld [vmem:[#allocation8 + $0x10] sm:$0xff]
        %v702 = vld [vmem:[#allocation8 + $0x18] sm:$0xff]
        %v703 = vld [vmem:[#allocation8 + $0x20] sm:$0xff]
        %v704 = vld [vmem:[#allocation8 + $0x28] sm:$0xff]
        %v705 = vld [vmem:[#allocation8 + $0x30] sm:$0xff]
        %v706 = vld [vmem:[#allocation8 + $0x38] sm:$0xff]
        %v707 = vld [vmem:[#allocation8 + $0x40] sm:$0xff]
        %v708 = vld [vmem:[#allocation8 + $0x48] sm:$0xff]
        %v709 = vld [vmem:[#allocation8 + $0x50] sm:$0xff]
        %v710 = vld [vmem:[#allocation8 + $0x58] sm:$0xff]
        %v711 = vld [vmem:[#allocation8 + $0x60] sm:$0xff]
        %v712 = vld [vmem:[#allocation8 + $0x68] sm:$0xff]
        %v713 = vld [vmem:[#allocation8 + $0x70] sm:$0xff]
        %v714 = vld [vmem:[#allocation8 + $0x78] sm:$0xff]
        %715 = vmatprep.subr.mxu0 0.0
        %716 = vmatpush1.msra.mxu0 %v699
        %717 = vmatprep.subr.mxu0 0.0
        %718 = vmatpush1.msra.mxu0 %v700
        %719 = vmatprep.subr.mxu0 0.0
        %720 = vmatpush1.msra.mxu0 %v701
        %721 = vmatprep.subr.mxu0 0.0
        %722 = vmatpush1.msra.mxu0 %v702
        %723 = vmatprep.subr.mxu0 0.0
        %724 = vmatpush1.msra.mxu0 %v703
        %725 = vmatprep.subr.mxu0 0.0
        %726 = vmatpush1.msra.mxu0 %v704
        %727 = vmatprep.subr.mxu0 0.0
        %728 = vmatpush1.msra.mxu0 %v705
        %729 = vmatprep.subr.mxu0 0.0
        %730 = vmatpush1.msra.mxu0 %v706
        %731 = vmatprep.subr.mxu0 0.0
        %732 = vmatpush1.msra.mxu0 %v707
        %733 = vmatprep.subr.mxu0 0.0
        %734 = vmatpush1.msra.mxu0 %v708
        %735 = vmatprep.subr.mxu0 0.0
        %736 = vmatpush1.msra.mxu0 %v709
        %737 = vmatprep.subr.mxu0 0.0
        %738 = vmatpush1.msra.mxu0 %v710
        %739 = vmatprep.subr.mxu0 0.0
        %740 = vmatpush1.msra.mxu0 %v711
        %741 = vmatprep.subr.mxu0 0.0
        %742 = vmatpush1.msra.mxu0 %v712
        %743 = vmatprep.subr.mxu0 0.0
        %744 = vmatpush1.msra.mxu0 %v713
        %745 = vmatprep.subr.mxu0 0.0
        %746 = vmatpush1.msra.mxu0 %v714
        %747 = vmatprep.subr.mxu0 0.0
        %748 = vmatpush1.msra.mxu0 0.0
        %749 = vmatprep.subr.mxu0 0.0
        %750 = vmatpush1.msra.mxu0 0.0
        %751 = vmatprep.subr.mxu0 0.0
        %752 = vmatpush1.msra.mxu0 0.0
        %753 = vmatprep.subr.mxu0 0.0
        %754 = vmatpush1.msra.mxu0 0.0
        %755 = vmatprep.subr.mxu0 0.0
        %756 = vmatpush1.msra.mxu0 0.0
        %757 = vmatprep.subr.mxu0 0.0
        %758 = vmatpush1.msra.mxu0 0.0
        %759 = vmatprep.subr.mxu0 0.0
        %760 = vmatpush1.msra.mxu0 0.0
        %761 = vmatprep.subr.mxu0 0.0
        %762 = vmatpush1.msra.mxu0 0.0
        %763 = vmatprep.subr.mxu0 0.0
        %764 = vmatpush1.msra.mxu0 0.0
        %765 = vmatprep.subr.mxu0 0.0
        %766 = vmatpush1.msra.mxu0 0.0
        %767 = vmatprep.subr.mxu0 0.0
        %768 = vmatpush1.msra.mxu0 0.0
        %769 = vmatprep.subr.mxu0 0.0
        %770 = vmatpush1.msra.mxu0 0.0
        %771 = vmatprep.subr.mxu0 0.0
        %772 = vmatpush1.msra.mxu0 0.0
        %773 = vmatprep.subr.mxu0 0.0
        %774 = vmatpush1.msra.mxu0 0.0
        %775 = vmatprep.subr.mxu0 0.0
        %776 = vmatpush1.msra.mxu0 0.0
        %777 = vmatprep.subr.mxu0 0.0
        %778 = vmatpush1.msra.mxu0 0.0
        %779 = vmatprep.mubr.f32.mxu0 0.0
        %780 = vmatmul.mubr.f32.gmra.mrb[0].mxu0 %v506
        %v781 = vpop.f32.mrb[0].mxu0
        %v782 = vadd.f32 0.0, %v781
        %v783 = vpop.f32.mrb[0].mxu0
        %784 = vmatprep.mubr.f32.mxu0 0.0
        %785 = vmatmul.mubr.f32.gmra.mrb[0].mxu0 %v507
        %v786 = vpop.f32.mrb[0].mxu0
        %v787 = vadd.f32 0.0, %v786
        %v788 = vpop.f32.mrb[0].mxu0
        %789 = vdwg.mxu0
        %s790 = scalar_lea.vmem [#allocation2], 64
        %791 = vst [vmem:[%s790 + $0x8] sm:$0xff] %v782
        %792 = vst [vmem:[%s790 + $0x10] sm:$0xff] %v787
        %v793 = vld [vmem:[#allocation8] sm:$0xff]
        %v794 = vld [vmem:[#allocation8 + $0x8] sm:$0xff]
        %v795 = vld [vmem:[#allocation8 + $0x10] sm:$0xff]
        %v796 = vld [vmem:[#allocation8 + $0x18] sm:$0xff]
        %v797 = vld [vmem:[#allocation8 + $0x20] sm:$0xff]
        %v798 = vld [vmem:[#allocation8 + $0x28] sm:$0xff]
        %v799 = vld [vmem:[#allocation8 + $0x30] sm:$0xff]
        %v800 = vld [vmem:[#allocation8 + $0x38] sm:$0xff]
        %v801 = vld [vmem:[#allocation8 + $0x40] sm:$0xff]
        %v802 = vld [vmem:[#allocation8 + $0x48] sm:$0xff]
        %v803 = vld [vmem:[#allocation8 + $0x50] sm:$0xff]
        %v804 = vld [vmem:[#allocation8 + $0x58] sm:$0xff]
        %v805 = vld [vmem:[#allocation8 + $0x60] sm:$0xff]
        %v806 = vld [vmem:[#allocation8 + $0x68] sm:$0xff]
        %v807 = vld [vmem:[#allocation8 + $0x70] sm:$0xff]
        %v808 = vld [vmem:[#allocation8 + $0x78] sm:$0xff]
        %809 = vmatprep.subr.mxu0 0.0
        %810 = vmatpush1.msra.mxu0 %v793
        %811 = vmatprep.subr.mxu0 0.0
        %812 = vmatpush1.msra.mxu0 %v794
        %813 = vmatprep.subr.mxu0 0.0
        %814 = vmatpush1.msra.mxu0 %v795
        %815 = vmatprep.subr.mxu0 0.0
        %816 = vmatpush1.msra.mxu0 %v796
        %817 = vmatprep.subr.mxu0 0.0
        %818 = vmatpush1.msra.mxu0 %v797
        %819 = vmatprep.subr.mxu0 0.0
        %820 = vmatpush1.msra.mxu0 %v798
        %821 = vmatprep.subr.mxu0 0.0
        %822 = vmatpush1.msra.mxu0 %v799
        %823 = vmatprep.subr.mxu0 0.0
        %824 = vmatpush1.msra.mxu0 %v800
        %825 = vmatprep.subr.mxu0 0.0
        %826 = vmatpush1.msra.mxu0 %v801
        %827 = vmatprep.subr.mxu0 0.0
        %828 = vmatpush1.msra.mxu0 %v802
        %829 = vmatprep.subr.mxu0 0.0
        %830 = vmatpush1.msra.mxu0 %v803
        %831 = vmatprep.subr.mxu0 0.0
        %832 = vmatpush1.msra.mxu0 %v804
        %833 = vmatprep.subr.mxu0 0.0
        %834 = vmatpush1.msra.mxu0 %v805
        %835 = vmatprep.subr.mxu0 0.0
        %836 = vmatpush1.msra.mxu0 %v806
        %837 = vmatprep.subr.mxu0 0.0
        %838 = vmatpush1.msra.mxu0 %v807
        %839 = vmatprep.subr.mxu0 0.0
        %840 = vmatpush1.msra.mxu0 %v808
        %841 = vmatprep.subr.mxu0 0.0
        %842 = vmatpush1.msra.mxu0 0.0
        %843 = vmatprep.subr.mxu0 0.0
        %844 = vmatpush1.msra.mxu0 0.0
        %845 = vmatprep.subr.mxu0 0.0
        %846 = vmatpush1.msra.mxu0 0.0
        %847 = vmatprep.subr.mxu0 0.0
        %848 = vmatpush1.msra.mxu0 0.0
        %849 = vmatprep.subr.mxu0 0.0
        %850 = vmatpush1.msra.mxu0 0.0
        %851 = vmatprep.subr.mxu0 0.0
        %852 = vmatpush1.msra.mxu0 0.0
        %853 = vmatprep.subr.mxu0 0.0
        %854 = vmatpush1.msra.mxu0 0.0
        %855 = vmatprep.subr.mxu0 0.0
        %856 = vmatpush1.msra.mxu0 0.0
        %857 = vmatprep.subr.mxu0 0.0
        %858 = vmatpush1.msra.mxu0 0.0
        %859 = vmatprep.subr.mxu0 0.0
        %860 = vmatpush1.msra.mxu0 0.0
        %861 = vmatprep.subr.mxu0 0.0
        %862 = vmatpush1.msra.mxu0 0.0
        %863 = vmatprep.subr.mxu0 0.0
        %864 = vmatpush1.msra.mxu0 0.0
        %865 = vmatprep.subr.mxu0 0.0
        %866 = vmatpush1.msra.mxu0 0.0
        %867 = vmatprep.subr.mxu0 0.0
        %868 = vmatpush1.msra.mxu0 0.0
        %869 = vmatprep.subr.mxu0 0.0
        %870 = vmatpush1.msra.mxu0 0.0
        %871 = vmatprep.subr.mxu0 0.0
        %872 = vmatpush1.msra.mxu0 0.0
        %873 = vmatprep.mubr.f32.mxu0 0.0
        %874 = vmatmul.mubr.f32.gmra.mrb[0].mxu0 %v508
        %v875 = vpop.f32.mrb[0].mxu0
        %v876 = vadd.f32 0.0, %v875
        %v877 = vpop.f32.mrb[0].mxu0
        %878 = vmatprep.mubr.f32.mxu0 0.0
        %879 = vmatmul.mubr.f32.gmra.mrb[0].mxu0 %v509
        %v880 = vpop.f32.mrb[0].mxu0
        %v881 = vadd.f32 0.0, %v880
        %v882 = vpop.f32.mrb[0].mxu0
        %883 = vdwg.mxu0
        %s884 = scalar_lea.vmem [#allocation2], 96
        %885 = vst [vmem:[%s884 + $0x8] sm:$0xff] %v876
        %886 = vst [vmem:[%s884 + $0x10] sm:$0xff] %v881
        %v887 = vmul.f32 %v506, %v506
        %v888 = vmul.f32 %v507, %v507
        %v889 = vld [vmem:[#allocation8] sm:$0xff]
        %v890 = vld [vmem:[#allocation8 + $0x8] sm:$0xff]
        %v891 = vld [vmem:[#allocation8 + $0x10] sm:$0xff]
        %v892 = vld [vmem:[#allocation8 + $0x18] sm:$0xff]
        %v893 = vld [vmem:[#allocation8 + $0x20] sm:$0xff]
        %v894 = vld [vmem:[#allocation8 + $0x28] sm:$0xff]
        %v895 = vld [vmem:[#allocation8 + $0x30] sm:$0xff]
        %v896 = vld [vmem:[#allocation8 + $0x38] sm:$0xff]
        %v897 = vld [vmem:[#allocation8 + $0x40] sm:$0xff]
        %v898 = vld [vmem:[#allocation8 + $0x48] sm:$0xff]
        %v899 = vld [vmem:[#allocation8 + $0x50] sm:$0xff]
        %v900 = vld [vmem:[#allocation8 + $0x58] sm:$0xff]
        %v901 = vld [vmem:[#allocation8 + $0x60] sm:$0xff]
        %v902 = vld [vmem:[#allocation8 + $0x68] sm:$0xff]
        %v903 = vld [vmem:[#allocation8 + $0x70] sm:$0xff]
        %v904 = vld [vmem:[#allocation8 + $0x78] sm:$0xff]
        %905 = vmatprep.subr.mxu0 0.0
        %906 = vmatpush1.msra.mxu0 %v889
        %907 = vmatprep.subr.mxu0 0.0
        %908 = vmatpush1.msra.mxu0 %v890
        %909 = vmatprep.subr.mxu0 0.0
        %910 = vmatpush1.msra.mxu0 %v891
        %911 = vmatprep.subr.mxu0 0.0
        %912 = vmatpush1.msra.mxu0 %v892
        %913 = vmatprep.subr.mxu0 0.0
        %914 = vmatpush1.msra.mxu0 %v893
        %915 = vmatprep.subr.mxu0 0.0
        %916 = vmatpush1.msra.mxu0 %v894
        %917 = vmatprep.subr.mxu0 0.0
        %918 = vmatpush1.msra.mxu0 %v895
        %919 = vmatprep.subr.mxu0 0.0
        %920 = vmatpush1.msra.mxu0 %v896
        %921 = vmatprep.subr.mxu0 0.0
        %922 = vmatpush1.msra.mxu0 %v897
        %923 = vmatprep.subr.mxu0 0.0
        %924 = vmatpush1.msra.mxu0 %v898
        %925 = vmatprep.subr.mxu0 0.0
        %926 = vmatpush1.msra.mxu0 %v899
        %927 = vmatprep.subr.mxu0 0.0
        %928 = vmatpush1.msra.mxu0 %v900
        %929 = vmatprep.subr.mxu0 0.0
        %930 = vmatpush1.msra.mxu0 %v901
        %931 = vmatprep.subr.mxu0 0.0
        %932 = vmatpush1.msra.mxu0 %v902
        %933 = vmatprep.subr.mxu0 0.0
        %934 = vmatpush1.msra.mxu0 %v903
        %935 = vmatprep.subr.mxu0 0.0
        %936 = vmatpush1.msra.mxu0 %v904
        %937 = vmatprep.subr.mxu0 0.0
        %938 = vmatpush1.msra.mxu0 0.0
        %939 = vmatprep.subr.mxu0 0.0
        %940 = vmatpush1.msra.mxu0 0.0
        %941 = vmatprep.subr.mxu0 0.0
        %942 = vmatpush1.msra.mxu0 0.0
        %943 = vmatprep.subr.mxu0 0.0
        %944 = vmatpush1.msra.mxu0 0.0
        %945 = vmatprep.subr.mxu0 0.0
        %946 = vmatpush1.msra.mxu0 0.0
        %947 = vmatprep.subr.mxu0 0.0
        %948 = vmatpush1.msra.mxu0 0.0
        %949 = vmatprep.subr.mxu0 0.0
        %950 = vmatpush1.msra.mxu0 0.0
        %951 = vmatprep.subr.mxu0 0.0
        %952 = vmatpush1.msra.mxu0 0.0
        %953 = vmatprep.subr.mxu0 0.0
        %954 = vmatpush1.msra.mxu0 0.0
        %955 = vmatprep.subr.mxu0 0.0
        %956 = vmatpush1.msra.mxu0 0.0
        %957 = vmatprep.subr.mxu0 0.0
        %958 = vmatpush1.msra.mxu0 0.0
        %959 = vmatprep.subr.mxu0 0.0
        %960 = vmatpush1.msra.mxu0 0.0
        %961 = vmatprep.subr.mxu0 0.0
        %962 = vmatpush1.msra.mxu0 0.0
        %963 = vmatprep.subr.mxu0 0.0
        %964 = vmatpush1.msra.mxu0 0.0
        %965 = vmatprep.subr.mxu0 0.0
        %966 = vmatpush1.msra.mxu0 0.0
        %967 = vmatprep.subr.mxu0 0.0
        %968 = vmatpush1.msra.mxu0 0.0
        %969 = vmatprep.mubr.f32.mxu0 0.0
        %970 = vmatmul.mubr.f32.gmra.mrb[0].mxu0 %v887
        %v971 = vpop.f32.mrb[0].mxu0
        %v972 = vadd.f32 0.0, %v971
        %v973 = vpop.f32.mrb[0].mxu0
        %974 = vmatprep.mubr.f32.mxu0 0.0
        %975 = vmatmul.mubr.f32.gmra.mrb[0].mxu0 %v888
        %v976 = vpop.f32.mrb[0].mxu0
        %v977 = vadd.f32 0.0, %v976
        %v978 = vpop.f32.mrb[0].mxu0
        %979 = vdwg.mxu0
        %s980 = scalar_lea.vmem [#allocation2], 128
        %981 = vst [vmem:[%s980 + $0x8] sm:$0xff] %v972
        %982 = vst [vmem:[%s980 + $0x10] sm:$0xff] %v977
        %v983 = vmul.f32 %v508, %v508
        %v984 = vmul.f32 %v509, %v509
        %v985 = vld [vmem:[#allocation8] sm:$0xff]
        %v986 = vld [vmem:[#allocation8 + $0x8] sm:$0xff]
        %v987 = vld [vmem:[#allocation8 + $0x10] sm:$0xff]
        %v988 = vld [vmem:[#allocation8 + $0x18] sm:$0xff]
        %v989 = vld [vmem:[#allocation8 + $0x20] sm:$0xff]
        %v990 = vld [vmem:[#allocation8 + $0x28] sm:$0xff]
        %v991 = vld [vmem:[#allocation8 + $0x30] sm:$0xff]
        %v992 = vld [vmem:[#allocation8 + $0x38] sm:$0xff]
        %v993 = vld [vmem:[#allocation8 + $0x40] sm:$0xff]
        %v994 = vld [vmem:[#allocation8 + $0x48] sm:$0xff]
        %v995 = vld [vmem:[#allocation8 + $0x50] sm:$0xff]
        %v996 = vld [vmem:[#allocation8 + $0x58] sm:$0xff]
        %v997 = vld [vmem:[#allocation8 + $0x60] sm:$0xff]
        %v998 = vld [vmem:[#allocation8 + $0x68] sm:$0xff]
        %v999 = vld [vmem:[#allocation8 + $0x70] sm:$0xff]
        %v1000 = vld [vmem:[#allocation8 + $0x78] sm:$0xff]
        %1001 = vmatprep.subr.mxu0 0.0
        %1002 = vmatpush1.msra.mxu0 %v985
        %1003 = vmatprep.subr.mxu0 0.0
        %1004 = vmatpush1.msra.mxu0 %v986
        %1005 = vmatprep.subr.mxu0 0.0
        %1006 = vmatpush1.msra.mxu0 %v987
        %1007 = vmatprep.subr.mxu0 0.0
        %1008 = vmatpush1.msra.mxu0 %v988
        %1009 = vmatprep.subr.mxu0 0.0
        %1010 = vmatpush1.msra.mxu0 %v989
        %1011 = vmatprep.subr.mxu0 0.0
        %1012 = vmatpush1.msra.mxu0 %v990
        %1013 = vmatprep.subr.mxu0 0.0
        %1014 = vmatpush1.msra.mxu0 %v991
        %1015 = vmatprep.subr.mxu0 0.0
        %1016 = vmatpush1.msra.mxu0 %v992
        %1017 = vmatprep.subr.mxu0 0.0
        %1018 = vmatpush1.msra.mxu0 %v993
        %1019 = vmatprep.subr.mxu0 0.0
        %1020 = vmatpush1.msra.mxu0 %v994
        %1021 = vmatprep.subr.mxu0 0.0
        %1022 = vmatpush1.msra.mxu0 %v995
        %1023 = vmatprep.subr.mxu0 0.0
        %1024 = vmatpush1.msra.mxu0 %v996
        %1025 = vmatprep.subr.mxu0 0.0
        %1026 = vmatpush1.msra.mxu0 %v997
        %1027 = vmatprep.subr.mxu0 0.0
        %1028 = vmatpush1.msra.mxu0 %v998
        %1029 = vmatprep.subr.mxu0 0.0
        %1030 = vmatpush1.msra.mxu0 %v999
        %1031 = vmatprep.subr.mxu0 0.0
        %1032 = vmatpush1.msra.mxu0 %v1000
        %1033 = vmatprep.subr.mxu0 0.0
        %1034 = vmatpush1.msra.mxu0 0.0
        %1035 = vmatprep.subr.mxu0 0.0
        %1036 = vmatpush1.msra.mxu0 0.0
        %1037 = vmatprep.subr.mxu0 0.0
        %1038 = vmatpush1.msra.mxu0 0.0
        %1039 = vmatprep.subr.mxu0 0.0
        %1040 = vmatpush1.msra.mxu0 0.0
        %1041 = vmatprep.subr.mxu0 0.0
        %1042 = vmatpush1.msra.mxu0 0.0
        %1043 = vmatprep.subr.mxu0 0.0
        %1044 = vmatpush1.msra.mxu0 0.0
        %1045 = vmatprep.subr.mxu0 0.0
        %1046 = vmatpush1.msra.mxu0 0.0
        %1047 = vmatprep.subr.mxu0 0.0
        %1048 = vmatpush1.msra.mxu0 0.0
        %1049 = vmatprep.subr.mxu0 0.0
        %1050 = vmatpush1.msra.mxu0 0.0
        %1051 = vmatprep.subr.mxu0 0.0
        %1052 = vmatpush1.msra.mxu0 0.0
        %1053 = vmatprep.subr.mxu0 0.0
        %1054 = vmatpush1.msra.mxu0 0.0
        %1055 = vmatprep.subr.mxu0 0.0
        %1056 = vmatpush1.msra.mxu0 0.0
        %1057 = vmatprep.subr.mxu0 0.0
        %1058 = vmatpush1.msra.mxu0 0.0
        %1059 = vmatprep.subr.mxu0 0.0
        %1060 = vmatpush1.msra.mxu0 0.0
        %1061 = vmatprep.subr.mxu0 0.0
        %1062 = vmatpush1.msra.mxu0 0.0
        %1063 = vmatprep.subr.mxu0 0.0
        %1064 = vmatpush1.msra.mxu0 0.0
        %1065 = vmatprep.mubr.f32.mxu0 0.0
        %1066 = vmatmul.mubr.f32.gmra.mrb[0].mxu0 %v983
        %v1067 = vpop.f32.mrb[0].mxu0
        %v1068 = vadd.f32 0.0, %v1067
        %v1069 = vpop.f32.mrb[0].mxu0
        %1070 = vmatprep.mubr.f32.mxu0 0.0
        %1071 = vmatmul.mubr.f32.gmra.mrb[0].mxu0 %v984
        %v1072 = vpop.f32.mrb[0].mxu0
        %v1073 = vadd.f32 0.0, %v1072
        %v1074 = vpop.f32.mrb[0].mxu0
        %1075 = vdwg.mxu0
        %s1076 = scalar_lea.vmem [#allocation2], 160
        %1077 = vst [vmem:[%s1076 + $0x8] sm:$0xff] %v1068
        %1078 = vst [vmem:[%s1076 + $0x10] sm:$0xff] %v1073
        %v1079 = vmul.f32 %v506, %v508
        %v1080 = vmul.f32 %v507, %v509
        %v1081 = vld [vmem:[#allocation8] sm:$0xff]
        %v1082 = vld [vmem:[#allocation8 + $0x8] sm:$0xff]
        %v1083 = vld [vmem:[#allocation8 + $0x10] sm:$0xff]
        %v1084 = vld [vmem:[#allocation8 + $0x18] sm:$0xff]
        %v1085 = vld [vmem:[#allocation8 + $0x20] sm:$0xff]
        %v1086 = vld [vmem:[#allocation8 + $0x28] sm:$0xff]
        %v1087 = vld [vmem:[#allocation8 + $0x30] sm:$0xff]
        %v1088 = vld [vmem:[#allocation8 + $0x38] sm:$0xff]
        %v1089 = vld [vmem:[#allocation8 + $0x40] sm:$0xff]
        %v1090 = vld [vmem:[#allocation8 + $0x48] sm:$0xff]
        %v1091 = vld [vmem:[#allocation8 + $0x50] sm:$0xff]
        %v1092 = vld [vmem:[#allocation8 + $0x58] sm:$0xff]
        %v1093 = vld [vmem:[#allocation8 + $0x60] sm:$0xff]
        %v1094 = vld [vmem:[#allocation8 + $0x68] sm:$0xff]
        %v1095 = vld [vmem:[#allocation8 + $0x70] sm:$0xff]
        %v1096 = vld [vmem:[#allocation8 + $0x78] sm:$0xff]
        %1097 = vmatprep.subr.mxu0 0.0
        %1098 = vmatpush1.msra.mxu0 %v1081
        %1099 = vmatprep.subr.mxu0 0.0
        %1100 = vmatpush1.msra.mxu0 %v1082
        %1101 = vmatprep.subr.mxu0 0.0
        %1102 = vmatpush1.msra.mxu0 %v1083
        %1103 = vmatprep.subr.mxu0 0.0
        %1104 = vmatpush1.msra.mxu0 %v1084
        %1105 = vmatprep.subr.mxu0 0.0
        %1106 = vmatpush1.msra.mxu0 %v1085
        %1107 = vmatprep.subr.mxu0 0.0
        %1108 = vmatpush1.msra.mxu0 %v1086
        %1109 = vmatprep.subr.mxu0 0.0
        %1110 = vmatpush1.msra.mxu0 %v1087
        %1111 = vmatprep.subr.mxu0 0.0
        %1112 = vmatpush1.msra.mxu0 %v1088
        %1113 = vmatprep.subr.mxu0 0.0
        %1114 = vmatpush1.msra.mxu0 %v1089
        %1115 = vmatprep.subr.mxu0 0.0
        %1116 = vmatpush1.msra.mxu0 %v1090
        %1117 = vmatprep.subr.mxu0 0.0
        %1118 = vmatpush1.msra.mxu0 %v1091
        %1119 = vmatprep.subr.mxu0 0.0
        %1120 = vmatpush1.msra.mxu0 %v1092
        %1121 = vmatprep.subr.mxu0 0.0
        %1122 = vmatpush1.msra.mxu0 %v1093
        %1123 = vmatprep.subr.mxu0 0.0
        %1124 = vmatpush1.msra.mxu0 %v1094
        %1125 = vmatprep.subr.mxu0 0.0
        %1126 = vmatpush1.msra.mxu0 %v1095
        %1127 = vmatprep.subr.mxu0 0.0
        %1128 = vmatpush1.msra.mxu0 %v1096
        %1129 = vmatprep.subr.mxu0 0.0
        %1130 = vmatpush1.msra.mxu0 0.0
        %1131 = vmatprep.subr.mxu0 0.0
        %1132 = vmatpush1.msra.mxu0 0.0
        %1133 = vmatprep.subr.mxu0 0.0
        %1134 = vmatpush1.msra.mxu0 0.0
        %1135 = vmatprep.subr.mxu0 0.0
        %1136 = vmatpush1.msra.mxu0 0.0
        %1137 = vmatprep.subr.mxu0 0.0
        %1138 = vmatpush1.msra.mxu0 0.0
        %1139 = vmatprep.subr.mxu0 0.0
        %1140 = vmatpush1.msra.mxu0 0.0
        %1141 = vmatprep.subr.mxu0 0.0
        %1142 = vmatpush1.msra.mxu0 0.0
        %1143 = vmatprep.subr.mxu0 0.0
        %1144 = vmatpush1.msra.mxu0 0.0
        %1145 = vmatprep.subr.mxu0 0.0
        %1146 = vmatpush1.msra.mxu0 0.0
        %1147 = vmatprep.subr.mxu0 0.0
        %1148 = vmatpush1.msra.mxu0 0.0
        %1149 = vmatprep.subr.mxu0 0.0
        %1150 = vmatpush1.msra.mxu0 0.0
        %1151 = vmatprep.subr.mxu0 0.0
        %1152 = vmatpush1.msra.mxu0 0.0
        %1153 = vmatprep.subr.mxu0 0.0
        %1154 = vmatpush1.msra.mxu0 0.0
        %1155 = vmatprep.subr.mxu0 0.0
        %1156 = vmatpush1.msra.mxu0 0.0
        %1157 = vmatprep.subr.mxu0 0.0
        %1158 = vmatpush1.msra.mxu0 0.0
        %1159 = vmatprep.subr.mxu0 0.0
        %1160 = vmatpush1.msra.mxu0 0.0
        %1161 = vmatprep.mubr.f32.mxu0 0.0
        %1162 = vmatmul.mubr.f32.gmra.mrb[0].mxu0 %v1079
        %v1163 = vpop.f32.mrb[0].mxu0
        %v1164 = vadd.f32 0.0, %v1163
        %v1165 = vpop.f32.mrb[0].mxu0
        %1166 = vmatprep.mubr.f32.mxu0 0.0
        %1167 = vmatmul.mubr.f32.gmra.mrb[0].mxu0 %v1080
        %v1168 = vpop.f32.mrb[0].mxu0
        %v1169 = vadd.f32 0.0, %v1168
        %v1170 = vpop.f32.mrb[0].mxu0
        %1171 = vdwg.mxu0
        %s1172 = scalar_lea.vmem [#allocation2], 192
        %1173 = vst [vmem:[%s1172 + $0x8] sm:$0xff] %v1164
        %1174 = vst [vmem:[%s1172 + $0x10] sm:$0xff] %v1169
        %v1175 = vld [vmem:[#allocation14] sm:$0xff]
        %v1176 = vld [vmem:[#allocation14 + $0x8] sm:$0xff]
        %v1177 = vld [vmem:[#allocation14 + $0x10] sm:$0xff]
        %v1178 = vld [vmem:[#allocation14 + $0x18] sm:$0xff]
        %v1179 = vld [vmem:[#allocation2] sm:$0xff]
        %v1180 = vld [vmem:[#allocation2 + $0x8] sm:$0xff]
        %v1181 = vld [vmem:[#allocation2 + $0x10] sm:$0xff]
        %v1182 = vld [vmem:[#allocation2 + $0x18] sm:$0xff]
        %vm1183 = vcmask 261120
        %v1185 = vsel %vm1183, %v1175, 0
        %v1188 = vsel %vm1183, %v1176, 0
        %v1191 = vsel %vm1183, %v1177, 0
        %v1194 = vsel %vm1183, %v1178, 0
        %1196 = vmatprep.subr.mxu0 0.0
        %1197 = vmatpush1.msra.mxu0 %v1179
        %1198 = vmatprep.subr.mxu0 0.0
        %1199 = vmatpush1.msra.mxu0 %v1180
        %1200 = vmatprep.subr.mxu0 0.0
        %1201 = vmatpush1.msra.mxu0 %v1181
        %1202 = vmatprep.subr.mxu0 0.0
        %1203 = vmatpush1.msra.mxu0 %v1182
        %1204 = vmatprep.subr.mxu0 0.0
        %1205 = vmatpush1.msra.mxu0 0.0
        %1206 = vmatprep.subr.mxu0 0.0
        %1207 = vmatpush1.msra.mxu0 0.0
        %1208 = vmatprep.subr.mxu0 0.0
        %1209 = vmatpush1.msra.mxu0 0.0
        %1210 = vmatprep.subr.mxu0 0.0
        %1211 = vmatpush1.msra.mxu0 0.0
        %1212 = vmatprep.subr.mxu0 0.0
        %1213 = vmatpush1.msra.mxu0 0.0
        %1214 = vmatprep.subr.mxu0 0.0
        %1215 = vmatpush1.msra.mxu0 0.0
        %1216 = vmatprep.subr.mxu0 0.0
        %1217 = vmatpush1.msra.mxu0 0.0
        %1218 = vmatprep.subr.mxu0 0.0
        %1219 = vmatpush1.msra.mxu0 0.0
        %1220 = vmatprep.subr.mxu0 0.0
        %1221 = vmatpush1.msra.mxu0 0.0
        %1222 = vmatprep.subr.mxu0 0.0
        %1223 = vmatpush1.msra.mxu0 0.0
        %1224 = vmatprep.subr.mxu0 0.0
        %1225 = vmatpush1.msra.mxu0 0.0
        %1226 = vmatprep.subr.mxu0 0.0
        %1227 = vmatpush1.msra.mxu0 0.0
        %1228 = vmatprep.subr.mxu0 0.0
        %1229 = vmatpush1.msra.mxu0 0.0
        %1230 = vmatprep.subr.mxu0 0.0
        %1231 = vmatpush1.msra.mxu0 0.0
        %1232 = vmatprep.subr.mxu0 0.0
        %1233 = vmatpush1.msra.mxu0 0.0
        %1234 = vmatprep.subr.mxu0 0.0
        %1235 = vmatpush1.msra.mxu0 0.0
        %1236 = vmatprep.subr.mxu0 0.0
        %1237 = vmatpush1.msra.mxu0 0.0
        %1238 = vmatprep.subr.mxu0 0.0
        %1239 = vmatpush1.msra.mxu0 0.0
        %1240 = vmatprep.subr.mxu0 0.0
        %1241 = vmatpush1.msra.mxu0 0.0
        %1242 = vmatprep.subr.mxu0 0.0
        %1243 = vmatpush1.msra.mxu0 0.0
        %1244 = vmatprep.subr.mxu0 0.0
        %1245 = vmatpush1.msra.mxu0 0.0
        %1246 = vmatprep.subr.mxu0 0.0
        %1247 = vmatpush1.msra.mxu0 0.0
        %1248 = vmatprep.subr.mxu0 0.0
        %1249 = vmatpush1.msra.mxu0 0.0
        %1250 = vmatprep.subr.mxu0 0.0
        %1251 = vmatpush1.msra.mxu0 0.0
        %1252 = vmatprep.subr.mxu0 0.0
        %1253 = vmatpush1.msra.mxu0 0.0
        %1254 = vmatprep.subr.mxu0 0.0
        %1255 = vmatpush1.msra.mxu0 0.0
        %1256 = vmatprep.subr.mxu0 0.0
        %1257 = vmatpush1.msra.mxu0 0.0
        %1258 = vmatprep.subr.mxu0 0.0
        %1259 = vmatpush1.msra.mxu0 0.0
        %1260 = vmatprep.mubr.f32.mxu0 0.0
        %1261 = vmatmul.mubr.f32.gmra.mrb[0].mxu0 %v1185
        %v1262 = vpop.f32.mrb[0].mxu0
        %v1263 = vadd.f32 0.0, %v1262
        %v1264 = vpop.f32.mrb[0].mxu0
        %1265 = vmatprep.mubr.f32.mxu0 0.0
        %1266 = vmatmul.mubr.f32.gmra.mrb[0].mxu0 %v1188
        %v1267 = vpop.f32.mrb[0].mxu0
        %v1268 = vadd.f32 0.0, %v1267
        %v1269 = vpop.f32.mrb[0].mxu0
        %1270 = vmatprep.mubr.f32.mxu0 0.0
        %1271 = vmatmul.mubr.f32.gmra.mrb[0].mxu0 %v1191
        %v1272 = vpop.f32.mrb[0].mxu0
        %v1273 = vadd.f32 0.0, %v1272
        %v1274 = vpop.f32.mrb[0].mxu0
        %1275 = vmatprep.mubr.f32.mxu0 0.0
        %1276 = vmatmul.mubr.f32.gmra.mrb[0].mxu0 %v1194
        %v1277 = vpop.f32.mrb[0].mxu0
        %v1278 = vadd.f32 0.0, %v1277
        %v1279 = vpop.f32.mrb[0].mxu0
        %1280 = vdwg.mxu0
        %v1281 = vld [vmem:[#allocation15] sm:$0xff]
        %v1282 = vld [vmem:[#allocation15 + $0x8] sm:$0xff]
        %v1283 = vld [vmem:[#allocation15 + $0x10] sm:$0xff]
        %v1284 = vld [vmem:[#allocation15 + $0x18] sm:$0xff]
        %v1285 = vld [vmem:[%s696] sm:$0xff]
        %v1286 = vld [vmem:[%s696 + $0x8] sm:$0xff]
        %v1287 = vld [vmem:[%s696 + $0x10] sm:$0xff]
        %v1288 = vld [vmem:[%s696 + $0x18] sm:$0xff]
        %v1290 = vsel %vm1183, %v1281, 0
        %v1293 = vsel %vm1183, %v1282, 0
        %v1296 = vsel %vm1183, %v1283, 0
        %v1299 = vsel %vm1183, %v1284, 0
        %1301 = vmatprep.subr.mxu0 0.0
        %1302 = vmatpush1.msra.mxu0 %v1285
        %1303 = vmatprep.subr.mxu0 0.0
        %1304 = vmatpush1.msra.mxu0 %v1286
        %1305 = vmatprep.subr.mxu0 0.0
        %1306 = vmatpush1.msra.mxu0 %v1287
        %1307 = vmatprep.subr.mxu0 0.0
        %1308 = vmatpush1.msra.mxu0 %v1288
        %1309 = vmatprep.subr.mxu0 0.0
        %1310 = vmatpush1.msra.mxu0 0.0
        %1311 = vmatprep.subr.mxu0 0.0
        %1312 = vmatpush1.msra.mxu0 0.0
        %1313 = vmatprep.subr.mxu0 0.0
        %1314 = vmatpush1.msra.mxu0 0.0
        %1315 = vmatprep.subr.mxu0 0.0
        %1316 = vmatpush1.msra.mxu0 0.0
        %1317 = vmatprep.subr.mxu0 0.0
        %1318 = vmatpush1.msra.mxu0 0.0
        %1319 = vmatprep.subr.mxu0 0.0
        %1320 = vmatpush1.msra.mxu0 0.0
        %1321 = vmatprep.subr.mxu0 0.0
        %1322 = vmatpush1.msra.mxu0 0.0
        %1323 = vmatprep.subr.mxu0 0.0
        %1324 = vmatpush1.msra.mxu0 0.0
        %1325 = vmatprep.subr.mxu0 0.0
        %1326 = vmatpush1.msra.mxu0 0.0
        %1327 = vmatprep.subr.mxu0 0.0
        %1328 = vmatpush1.msra.mxu0 0.0
        %1329 = vmatprep.subr.mxu0 0.0
        %1330 = vmatpush1.msra.mxu0 0.0
        %1331 = vmatprep.subr.mxu0 0.0
        %1332 = vmatpush1.msra.mxu0 0.0
        %1333 = vmatprep.subr.mxu0 0.0
        %1334 = vmatpush1.msra.mxu0 0.0
        %1335 = vmatprep.subr.mxu0 0.0
        %1336 = vmatpush1.msra.mxu0 0.0
        %1337 = vmatprep.subr.mxu0 0.0
        %1338 = vmatpush1.msra.mxu0 0.0
        %1339 = vmatprep.subr.mxu0 0.0
        %1340 = vmatpush1.msra.mxu0 0.0
        %1341 = vmatprep.subr.mxu0 0.0
        %1342 = vmatpush1.msra.mxu0 0.0
        %1343 = vmatprep.subr.mxu0 0.0
        %1344 = vmatpush1.msra.mxu0 0.0
        %1345 = vmatprep.subr.mxu0 0.0
        %1346 = vmatpush1.msra.mxu0 0.0
        %1347 = vmatprep.subr.mxu0 0.0
        %1348 = vmatpush1.msra.mxu0 0.0
        %1349 = vmatprep.subr.mxu0 0.0
        %1350 = vmatpush1.msra.mxu0 0.0
        %1351 = vmatprep.subr.mxu0 0.0
        %1352 = vmatpush1.msra.mxu0 0.0
        %1353 = vmatprep.subr.mxu0 0.0
        %1354 = vmatpush1.msra.mxu0 0.0
        %1355 = vmatprep.subr.mxu0 0.0
        %1356 = vmatpush1.msra.mxu0 0.0
        %1357 = vmatprep.subr.mxu0 0.0
        %1358 = vmatpush1.msra.mxu0 0.0
        %1359 = vmatprep.subr.mxu0 0.0
        %1360 = vmatpush1.msra.mxu0 0.0
        %1361 = vmatprep.subr.mxu0 0.0
        %1362 = vmatpush1.msra.mxu0 0.0
        %1363 = vmatprep.subr.mxu0 0.0
        %1364 = vmatpush1.msra.mxu0 0.0
        %1365 = vmatprep.mubr.f32.mxu0 0.0
        %1366 = vmatmul.mubr.f32.gmra.mrb[0].mxu0 %v1290
        %v1367 = vpop.f32.mrb[0].mxu0
        %v1368 = vadd.f32 0.0, %v1367
        %v1369 = vpop.f32.mrb[0].mxu0
        %1370 = vmatprep.mubr.f32.mxu0 0.0
        %1371 = vmatmul.mubr.f32.gmra.mrb[0].mxu0 %v1293
        %v1372 = vpop.f32.mrb[0].mxu0
        %v1373 = vadd.f32 0.0, %v1372
        %v1374 = vpop.f32.mrb[0].mxu0
        %1375 = vmatprep.mubr.f32.mxu0 0.0
        %1376 = vmatmul.mubr.f32.gmra.mrb[0].mxu0 %v1296
        %v1377 = vpop.f32.mrb[0].mxu0
        %v1378 = vadd.f32 0.0, %v1377
        %v1379 = vpop.f32.mrb[0].mxu0
        %1380 = vmatprep.mubr.f32.mxu0 0.0
        %1381 = vmatmul.mubr.f32.gmra.mrb[0].mxu0 %v1299
        %v1382 = vpop.f32.mrb[0].mxu0
        %v1383 = vadd.f32 0.0, %v1382
        %v1384 = vpop.f32.mrb[0].mxu0
        %1385 = vdwg.mxu0
        %v1386 = vld [vmem:[#allocation12] sm:$0xff]
        %v1387 = vld [vmem:[#allocation12 + $0x8] sm:$0xff]
        %v1388 = vld [vmem:[#allocation12 + $0x10] sm:$0xff]
        %v1389 = vld [vmem:[#allocation12 + $0x18] sm:$0xff]
        %v1390 = vld [vmem:[%s790] sm:$0xff]
        %v1391 = vld [vmem:[%s790 + $0x8] sm:$0xff]
        %v1392 = vld [vmem:[%s790 + $0x10] sm:$0xff]
        %v1393 = vld [vmem:[%s790 + $0x18] sm:$0xff]
        %v1395 = vsel %vm1183, %v1386, 0
        %v1398 = vsel %vm1183, %v1387, 0
        %v1401 = vsel %vm1183, %v1388, 0
        %v1404 = vsel %vm1183, %v1389, 0
        %1406 = vmatprep.subr.mxu0 0.0
        %1407 = vmatpush1.msra.mxu0 %v1390
        %1408 = vmatprep.subr.mxu0 0.0
        %1409 = vmatpush1.msra.mxu0 %v1391
        %1410 = vmatprep.subr.mxu0 0.0
        %1411 = vmatpush1.msra.mxu0 %v1392
        %1412 = vmatprep.subr.mxu0 0.0
        %1413 = vmatpush1.msra.mxu0 %v1393
        %1414 = vmatprep.subr.mxu0 0.0
        %1415 = vmatpush1.msra.mxu0 0.0
        %1416 = vmatprep.subr.mxu0 0.0
        %1417 = vmatpush1.msra.mxu0 0.0
        %1418 = vmatprep.subr.mxu0 0.0
        %1419 = vmatpush1.msra.mxu0 0.0
        %1420 = vmatprep.subr.mxu0 0.0
        %1421 = vmatpush1.msra.mxu0 0.0
        %1422 = vmatprep.subr.mxu0 0.0
        %1423 = vmatpush1.msra.mxu0 0.0
        %1424 = vmatprep.subr.mxu0 0.0
        %1425 = vmatpush1.msra.mxu0 0.0
        %1426 = vmatprep.subr.mxu0 0.0
        %1427 = vmatpush1.msra.mxu0 0.0
        %1428 = vmatprep.subr.mxu0 0.0
        %1429 = vmatpush1.msra.mxu0 0.0
        %1430 = vmatprep.subr.mxu0 0.0
        %1431 = vmatpush1.msra.mxu0 0.0
        %1432 = vmatprep.subr.mxu0 0.0
        %1433 = vmatpush1.msra.mxu0 0.0
        %1434 = vmatprep.subr.mxu0 0.0
        %1435 = vmatpush1.msra.mxu0 0.0
        %1436 = vmatprep.subr.mxu0 0.0
        %1437 = vmatpush1.msra.mxu0 0.0
        %1438 = vmatprep.subr.mxu0 0.0
        %1439 = vmatpush1.msra.mxu0 0.0
        %1440 = vmatprep.subr.mxu0 0.0
        %1441 = vmatpush1.msra.mxu0 0.0
        %1442 = vmatprep.subr.mxu0 0.0
        %1443 = vmatpush1.msra.mxu0 0.0
        %1444 = vmatprep.subr.mxu0 0.0
        %1445 = vmatpush1.msra.mxu0 0.0
        %1446 = vmatprep.subr.mxu0 0.0
        %1447 = vmatpush1.msra.mxu0 0.0
        %1448 = vmatprep.subr.mxu0 0.0
        %1449 = vmatpush1.msra.mxu0 0.0
        %1450 = vmatprep.subr.mxu0 0.0
        %1451 = vmatpush1.msra.mxu0 0.0
        %1452 = vmatprep.subr.mxu0 0.0
        %1453 = vmatpush1.msra.mxu0 0.0
        %1454 = vmatprep.subr.mxu0 0.0
        %1455 = vmatpush1.msra.mxu0 0.0
        %1456 = vmatprep.subr.mxu0 0.0
        %1457 = vmatpush1.msra.mxu0 0.0
        %1458 = vmatprep.subr.mxu0 0.0
        %1459 = vmatpush1.msra.mxu0 0.0
        %1460 = vmatprep.subr.mxu0 0.0
        %1461 = vmatpush1.msra.mxu0 0.0
        %1462 = vmatprep.subr.mxu0 0.0
        %1463 = vmatpush1.msra.mxu0 0.0
        %1464 = vmatprep.subr.mxu0 0.0
        %1465 = vmatpush1.msra.mxu0 0.0
        %1466 = vmatprep.subr.mxu0 0.0
        %1467 = vmatpush1.msra.mxu0 0.0
        %1468 = vmatprep.subr.mxu0 0.0
        %1469 = vmatpush1.msra.mxu0 0.0
        %1470 = vmatprep.mubr.f32.mxu0 0.0
        %1471 = vmatmul.mubr.f32.gmra.mrb[0].mxu0 %v1395
        %v1472 = vpop.f32.mrb[0].mxu0
        %v1473 = vadd.f32 0.0, %v1472
        %v1474 = vpop.f32.mrb[0].mxu0
        %1475 = vmatprep.mubr.f32.mxu0 0.0
        %1476 = vmatmul.mubr.f32.gmra.mrb[0].mxu0 %v1398
        %v1477 = vpop.f32.mrb[0].mxu0
        %v1478 = vadd.f32 0.0, %v1477
        %v1479 = vpop.f32.mrb[0].mxu0
        %1480 = vmatprep.mubr.f32.mxu0 0.0
        %1481 = vmatmul.mubr.f32.gmra.mrb[0].mxu0 %v1401
        %v1482 = vpop.f32.mrb[0].mxu0
        %v1483 = vadd.f32 0.0, %v1482
        %v1484 = vpop.f32.mrb[0].mxu0
        %1485 = vmatprep.mubr.f32.mxu0 0.0
        %1486 = vmatmul.mubr.f32.gmra.mrb[0].mxu0 %v1404
        %v1487 = vpop.f32.mrb[0].mxu0
        %v1488 = vadd.f32 0.0, %v1487
        %v1489 = vpop.f32.mrb[0].mxu0
        %1490 = vdwg.mxu0
        %v1491 = vmul.f32 %v1473, 0.11111111
        %v1492 = vmul.f32 %v1478, 0.11111111
        %v1493 = vmul.f32 %v1483, 0.11111111
        %v1494 = vmul.f32 %v1488, 0.11111111
        %v1495 = vld [vmem:[%s884] sm:$0xff]
        %v1496 = vld [vmem:[%s884 + $0x8] sm:$0xff]
        %v1497 = vld [vmem:[%s884 + $0x10] sm:$0xff]
        %v1498 = vld [vmem:[%s884 + $0x18] sm:$0xff]
        %1499 = vmatprep.subr.mxu0 0.0
        %1500 = vmatpush1.msra.mxu0 %v1495
        %1501 = vmatprep.subr.mxu0 0.0
        %1502 = vmatpush1.msra.mxu0 %v1496
        %1503 = vmatprep.subr.mxu0 0.0
        %1504 = vmatpush1.msra.mxu0 %v1497
        %1505 = vmatprep.subr.mxu0 0.0
        %1506 = vmatpush1.msra.mxu0 %v1498
        %1507 = vmatprep.subr.mxu0 0.0
        %1508 = vmatpush1.msra.mxu0 0.0
        %1509 = vmatprep.subr.mxu0 0.0
        %1510 = vmatpush1.msra.mxu0 0.0
        %1511 = vmatprep.subr.mxu0 0.0
        %1512 = vmatpush1.msra.mxu0 0.0
        %1513 = vmatprep.subr.mxu0 0.0
        %1514 = vmatpush1.msra.mxu0 0.0
        %1515 = vmatprep.subr.mxu0 0.0
        %1516 = vmatpush1.msra.mxu0 0.0
        %1517 = vmatprep.subr.mxu0 0.0
        %1518 = vmatpush1.msra.mxu0 0.0
        %1519 = vmatprep.subr.mxu0 0.0
        %1520 = vmatpush1.msra.mxu0 0.0
        %1521 = vmatprep.subr.mxu0 0.0
        %1522 = vmatpush1.msra.mxu0 0.0
        %1523 = vmatprep.subr.mxu0 0.0
        %1524 = vmatpush1.msra.mxu0 0.0
        %1525 = vmatprep.subr.mxu0 0.0
        %1526 = vmatpush1.msra.mxu0 0.0
        %1527 = vmatprep.subr.mxu0 0.0
        %1528 = vmatpush1.msra.mxu0 0.0
        %1529 = vmatprep.subr.mxu0 0.0
        %1530 = vmatpush1.msra.mxu0 0.0
        %1531 = vmatprep.subr.mxu0 0.0
        %1532 = vmatpush1.msra.mxu0 0.0
        %1533 = vmatprep.subr.mxu0 0.0
        %1534 = vmatpush1.msra.mxu0 0.0
        %1535 = vmatprep.subr.mxu0 0.0
        %1536 = vmatpush1.msra.mxu0 0.0
        %1537 = vmatprep.subr.mxu0 0.0
        %1538 = vmatpush1.msra.mxu0 0.0
        %1539 = vmatprep.subr.mxu0 0.0
        %1540 = vmatpush1.msra.mxu0 0.0
        %1541 = vmatprep.subr.mxu0 0.0
        %1542 = vmatpush1.msra.mxu0 0.0
        %1543 = vmatprep.subr.mxu0 0.0
        %1544 = vmatpush1.msra.mxu0 0.0
        %1545 = vmatprep.subr.mxu0 0.0
        %1546 = vmatpush1.msra.mxu0 0.0
        %1547 = vmatprep.subr.mxu0 0.0
        %1548 = vmatpush1.msra.mxu0 0.0
        %1549 = vmatprep.subr.mxu0 0.0
        %1550 = vmatpush1.msra.mxu0 0.0
        %1551 = vmatprep.subr.mxu0 0.0
        %1552 = vmatpush1.msra.mxu0 0.0
        %1553 = vmatprep.subr.mxu0 0.0
        %1554 = vmatpush1.msra.mxu0 0.0
        %1555 = vmatprep.subr.mxu0 0.0
        %1556 = vmatpush1.msra.mxu0 0.0
        %1557 = vmatprep.subr.mxu0 0.0
        %1558 = vmatpush1.msra.mxu0 0.0
        %1559 = vmatprep.subr.mxu0 0.0
        %1560 = vmatpush1.msra.mxu0 0.0
        %1561 = vmatprep.subr.mxu0 0.0
        %1562 = vmatpush1.msra.mxu0 0.0
        %1563 = vmatprep.mubr.f32.mxu0 0.0
        %1564 = vmatmul.mubr.f32.gmra.mrb[0].mxu0 %v1395
        %v1565 = vpop.f32.mrb[0].mxu0
        %v1566 = vadd.f32 0.0, %v1565
        %v1567 = vpop.f32.mrb[0].mxu0
        %1568 = vmatprep.mubr.f32.mxu0 0.0
        %1569 = vmatmul.mubr.f32.gmra.mrb[0].mxu0 %v1398
        %v1570 = vpop.f32.mrb[0].mxu0
        %v1571 = vadd.f32 0.0, %v1570
        %v1572 = vpop.f32.mrb[0].mxu0
        %1573 = vmatprep.mubr.f32.mxu0 0.0
        %1574 = vmatmul.mubr.f32.gmra.mrb[0].mxu0 %v1401
        %v1575 = vpop.f32.mrb[0].mxu0
        %v1576 = vadd.f32 0.0, %v1575
        %v1577 = vpop.f32.mrb[0].mxu0
        %1578 = vmatprep.mubr.f32.mxu0 0.0
        %1579 = vmatmul.mubr.f32.gmra.mrb[0].mxu0 %v1404
        %v1580 = vpop.f32.mrb[0].mxu0
        %v1581 = vadd.f32 0.0, %v1580
        %v1582 = vpop.f32.mrb[0].mxu0
        %1583 = vdwg.mxu0
        %v1584 = vmul.f32 %v1566, 0.11111111
        %v1585 = vmul.f32 %v1571, 0.11111111
        %v1586 = vmul.f32 %v1576, 0.11111111
        %v1587 = vmul.f32 %v1581, 0.11111111
        %v1588 = vld [vmem:[%s980] sm:$0xff]
        %v1589 = vld [vmem:[%s980 + $0x8] sm:$0xff]
        %v1590 = vld [vmem:[%s980 + $0x10] sm:$0xff]
        %v1591 = vld [vmem:[%s980 + $0x18] sm:$0xff]
        %1592 = vmatprep.subr.mxu0 0.0
        %1593 = vmatpush1.msra.mxu0 %v1588
        %1594 = vmatprep.subr.mxu0 0.0
        %1595 = vmatpush1.msra.mxu0 %v1589
        %1596 = vmatprep.subr.mxu0 0.0
        %1597 = vmatpush1.msra.mxu0 %v1590
        %1598 = vmatprep.subr.mxu0 0.0
        %1599 = vmatpush1.msra.mxu0 %v1591
        %1600 = vmatprep.subr.mxu0 0.0
        %1601 = vmatpush1.msra.mxu0 0.0
        %1602 = vmatprep.subr.mxu0 0.0
        %1603 = vmatpush1.msra.mxu0 0.0
        %1604 = vmatprep.subr.mxu0 0.0
        %1605 = vmatpush1.msra.mxu0 0.0
        %1606 = vmatprep.subr.mxu0 0.0
        %1607 = vmatpush1.msra.mxu0 0.0
        %1608 = vmatprep.subr.mxu0 0.0
        %1609 = vmatpush1.msra.mxu0 0.0
        %1610 = vmatprep.subr.mxu0 0.0
        %1611 = vmatpush1.msra.mxu0 0.0
        %1612 = vmatprep.subr.mxu0 0.0
        %1613 = vmatpush1.msra.mxu0 0.0
        %1614 = vmatprep.subr.mxu0 0.0
        %1615 = vmatpush1.msra.mxu0 0.0
        %1616 = vmatprep.subr.mxu0 0.0
        %1617 = vmatpush1.msra.mxu0 0.0
        %1618 = vmatprep.subr.mxu0 0.0
        %1619 = vmatpush1.msra.mxu0 0.0
        %1620 = vmatprep.subr.mxu0 0.0
        %1621 = vmatpush1.msra.mxu0 0.0
        %1622 = vmatprep.subr.mxu0 0.0
        %1623 = vmatpush1.msra.mxu0 0.0
        %1624 = vmatprep.subr.mxu0 0.0
        %1625 = vmatpush1.msra.mxu0 0.0
        %1626 = vmatprep.subr.mxu0 0.0
        %1627 = vmatpush1.msra.mxu0 0.0
        %1628 = vmatprep.subr.mxu0 0.0
        %1629 = vmatpush1.msra.mxu0 0.0
        %1630 = vmatprep.subr.mxu0 0.0
        %1631 = vmatpush1.msra.mxu0 0.0
        %1632 = vmatprep.subr.mxu0 0.0
        %1633 = vmatpush1.msra.mxu0 0.0
        %1634 = vmatprep.subr.mxu0 0.0
        %1635 = vmatpush1.msra.mxu0 0.0
        %1636 = vmatprep.subr.mxu0 0.0
        %1637 = vmatpush1.msra.mxu0 0.0
        %1638 = vmatprep.subr.mxu0 0.0
        %1639 = vmatpush1.msra.mxu0 0.0
        %1640 = vmatprep.subr.mxu0 0.0
        %1641 = vmatpush1.msra.mxu0 0.0
        %1642 = vmatprep.subr.mxu0 0.0
        %1643 = vmatpush1.msra.mxu0 0.0
        %1644 = vmatprep.subr.mxu0 0.0
        %1645 = vmatpush1.msra.mxu0 0.0
        %1646 = vmatprep.subr.mxu0 0.0
        %1647 = vmatpush1.msra.mxu0 0.0
        %1648 = vmatprep.subr.mxu0 0.0
        %1649 = vmatpush1.msra.mxu0 0.0
        %1650 = vmatprep.subr.mxu0 0.0
        %1651 = vmatpush1.msra.mxu0 0.0
        %1652 = vmatprep.subr.mxu0 0.0
        %1653 = vmatpush1.msra.mxu0 0.0
        %1654 = vmatprep.subr.mxu0 0.0
        %1655 = vmatpush1.msra.mxu0 0.0
        %1656 = vmatprep.mubr.f32.mxu0 0.0
        %1657 = vmatmul.mubr.f32.gmra.mrb[0].mxu0 %v1395
        %v1658 = vpop.f32.mrb[0].mxu0
        %v1659 = vadd.f32 0.0, %v1658
        %v1660 = vpop.f32.mrb[0].mxu0
        %1661 = vmatprep.mubr.f32.mxu0 0.0
        %1662 = vmatmul.mubr.f32.gmra.mrb[0].mxu0 %v1398
        %v1663 = vpop.f32.mrb[0].mxu0
        %v1664 = vadd.f32 0.0, %v1663
        %v1665 = vpop.f32.mrb[0].mxu0
        %1666 = vmatprep.mubr.f32.mxu0 0.0
        %1667 = vmatmul.mubr.f32.gmra.mrb[0].mxu0 %v1401
        %v1668 = vpop.f32.mrb[0].mxu0
        %v1669 = vadd.f32 0.0, %v1668
        %v1670 = vpop.f32.mrb[0].mxu0
        %1671 = vmatprep.mubr.f32.mxu0 0.0
        %1672 = vmatmul.mubr.f32.gmra.mrb[0].mxu0 %v1404
        %v1673 = vpop.f32.mrb[0].mxu0
        %v1674 = vadd.f32 0.0, %v1673
        %v1675 = vpop.f32.mrb[0].mxu0
        %1676 = vdwg.mxu0
        %v1677 = vmul.f32 %v1659, 0.11111111
        %v1678 = vmul.f32 %v1664, 0.11111111
        %v1679 = vmul.f32 %v1669, 0.11111111
        %v1680 = vmul.f32 %v1674, 0.11111111
        %v1681 = vld [vmem:[%s1076] sm:$0xff]
        %v1682 = vld [vmem:[%s1076 + $0x8] sm:$0xff]
        %v1683 = vld [vmem:[%s1076 + $0x10] sm:$0xff]
        %v1684 = vld [vmem:[%s1076 + $0x18] sm:$0xff]
        %1685 = vmatprep.subr.mxu0 0.0
        %1686 = vmatpush1.msra.mxu0 %v1681
        %1687 = vmatprep.subr.mxu0 0.0
        %1688 = vmatpush1.msra.mxu0 %v1682
        %1689 = vmatprep.subr.mxu0 0.0
        %1690 = vmatpush1.msra.mxu0 %v1683
        %1691 = vmatprep.subr.mxu0 0.0
        %1692 = vmatpush1.msra.mxu0 %v1684
        %1693 = vmatprep.subr.mxu0 0.0
        %1694 = vmatpush1.msra.mxu0 0.0
        %1695 = vmatprep.subr.mxu0 0.0
        %1696 = vmatpush1.msra.mxu0 0.0
        %1697 = vmatprep.subr.mxu0 0.0
        %1698 = vmatpush1.msra.mxu0 0.0
        %1699 = vmatprep.subr.mxu0 0.0
        %1700 = vmatpush1.msra.mxu0 0.0
        %1701 = vmatprep.subr.mxu0 0.0
        %1702 = vmatpush1.msra.mxu0 0.0
        %1703 = vmatprep.subr.mxu0 0.0
        %1704 = vmatpush1.msra.mxu0 0.0
        %1705 = vmatprep.subr.mxu0 0.0
        %1706 = vmatpush1.msra.mxu0 0.0
        %1707 = vmatprep.subr.mxu0 0.0
        %1708 = vmatpush1.msra.mxu0 0.0
        %1709 = vmatprep.subr.mxu0 0.0
        %1710 = vmatpush1.msra.mxu0 0.0
        %1711 = vmatprep.subr.mxu0 0.0
        %1712 = vmatpush1.msra.mxu0 0.0
        %1713 = vmatprep.subr.mxu0 0.0
        %1714 = vmatpush1.msra.mxu0 0.0
        %1715 = vmatprep.subr.mxu0 0.0
        %1716 = vmatpush1.msra.mxu0 0.0
        %1717 = vmatprep.subr.mxu0 0.0
        %1718 = vmatpush1.msra.mxu0 0.0
        %1719 = vmatprep.subr.mxu0 0.0
        %1720 = vmatpush1.msra.mxu0 0.0
        %1721 = vmatprep.subr.mxu0 0.0
        %1722 = vmatpush1.msra.mxu0 0.0
        %1723 = vmatprep.subr.mxu0 0.0
        %1724 = vmatpush1.msra.mxu0 0.0
        %1725 = vmatprep.subr.mxu0 0.0
        %1726 = vmatpush1.msra.mxu0 0.0
        %1727 = vmatprep.subr.mxu0 0.0
        %1728 = vmatpush1.msra.mxu0 0.0
        %1729 = vmatprep.subr.mxu0 0.0
        %1730 = vmatpush1.msra.mxu0 0.0
        %1731 = vmatprep.subr.mxu0 0.0
        %1732 = vmatpush1.msra.mxu0 0.0
        %1733 = vmatprep.subr.mxu0 0.0
        %1734 = vmatpush1.msra.mxu0 0.0
        %1735 = vmatprep.subr.mxu0 0.0
        %1736 = vmatpush1.msra.mxu0 0.0
        %1737 = vmatprep.subr.mxu0 0.0
        %1738 = vmatpush1.msra.mxu0 0.0
        %1739 = vmatprep.subr.mxu0 0.0
        %1740 = vmatpush1.msra.mxu0 0.0
        %1741 = vmatprep.subr.mxu0 0.0
        %1742 = vmatpush1.msra.mxu0 0.0
        %1743 = vmatprep.subr.mxu0 0.0
        %1744 = vmatpush1.msra.mxu0 0.0
        %1745 = vmatprep.subr.mxu0 0.0
        %1746 = vmatpush1.msra.mxu0 0.0
        %1747 = vmatprep.subr.mxu0 0.0
        %1748 = vmatpush1.msra.mxu0 0.0
        %1749 = vmatprep.mubr.f32.mxu0 0.0
        %1750 = vmatmul.mubr.f32.gmra.mrb[0].mxu0 %v1395
        %v1751 = vpop.f32.mrb[0].mxu0
        %v1752 = vadd.f32 0.0, %v1751
        %v1753 = vpop.f32.mrb[0].mxu0
        %1754 = vmatprep.mubr.f32.mxu0 0.0
        %1755 = vmatmul.mubr.f32.gmra.mrb[0].mxu0 %v1398
        %v1756 = vpop.f32.mrb[0].mxu0
        %v1757 = vadd.f32 0.0, %v1756
        %v1758 = vpop.f32.mrb[0].mxu0
        %1759 = vmatprep.mubr.f32.mxu0 0.0
        %1760 = vmatmul.mubr.f32.gmra.mrb[0].mxu0 %v1401
        %v1761 = vpop.f32.mrb[0].mxu0
        %v1762 = vadd.f32 0.0, %v1761
        %v1763 = vpop.f32.mrb[0].mxu0
        %1764 = vmatprep.mubr.f32.mxu0 0.0
        %1765 = vmatmul.mubr.f32.gmra.mrb[0].mxu0 %v1404
        %v1766 = vpop.f32.mrb[0].mxu0
        %v1767 = vadd.f32 0.0, %v1766
        %v1768 = vpop.f32.mrb[0].mxu0
        %1769 = vdwg.mxu0
        %v1770 = vmul.f32 %v1752, 0.11111111
        %v1771 = vmul.f32 %v1757, 0.11111111
        %v1772 = vmul.f32 %v1762, 0.11111111
        %v1773 = vmul.f32 %v1767, 0.11111111
        %v1774 = vld [vmem:[%s1172] sm:$0xff]
        %v1775 = vld [vmem:[%s1172 + $0x8] sm:$0xff]
        %v1776 = vld [vmem:[%s1172 + $0x10] sm:$0xff]
        %v1777 = vld [vmem:[%s1172 + $0x18] sm:$0xff]
        %1778 = vmatprep.subr.mxu0 0.0
        %1779 = vmatpush1.msra.mxu0 %v1774
        %1780 = vmatprep.subr.mxu0 0.0
        %1781 = vmatpush1.msra.mxu0 %v1775
        %1782 = vmatprep.subr.mxu0 0.0
        %1783 = vmatpush1.msra.mxu0 %v1776
        %1784 = vmatprep.subr.mxu0 0.0
        %1785 = vmatpush1.msra.mxu0 %v1777
        %1786 = vmatprep.subr.mxu0 0.0
        %1787 = vmatpush1.msra.mxu0 0.0
        %1788 = vmatprep.subr.mxu0 0.0
        %1789 = vmatpush1.msra.mxu0 0.0
        %1790 = vmatprep.subr.mxu0 0.0
        %1791 = vmatpush1.msra.mxu0 0.0
        %1792 = vmatprep.subr.mxu0 0.0
        %1793 = vmatpush1.msra.mxu0 0.0
        %1794 = vmatprep.subr.mxu0 0.0
        %1795 = vmatpush1.msra.mxu0 0.0
        %1796 = vmatprep.subr.mxu0 0.0
        %1797 = vmatpush1.msra.mxu0 0.0
        %1798 = vmatprep.subr.mxu0 0.0
        %1799 = vmatpush1.msra.mxu0 0.0
        %1800 = vmatprep.subr.mxu0 0.0
        %1801 = vmatpush1.msra.mxu0 0.0
        %1802 = vmatprep.subr.mxu0 0.0
        %1803 = vmatpush1.msra.mxu0 0.0
        %1804 = vmatprep.subr.mxu0 0.0
        %1805 = vmatpush1.msra.mxu0 0.0
        %1806 = vmatprep.subr.mxu0 0.0
        %1807 = vmatpush1.msra.mxu0 0.0
        %1808 = vmatprep.subr.mxu0 0.0
        %1809 = vmatpush1.msra.mxu0 0.0
        %1810 = vmatprep.subr.mxu0 0.0
        %1811 = vmatpush1.msra.mxu0 0.0
        %1812 = vmatprep.subr.mxu0 0.0
        %1813 = vmatpush1.msra.mxu0 0.0
        %1814 = vmatprep.subr.mxu0 0.0
        %1815 = vmatpush1.msra.mxu0 0.0
        %1816 = vmatprep.subr.mxu0 0.0
        %1817 = vmatpush1.msra.mxu0 0.0
        %1818 = vmatprep.subr.mxu0 0.0
        %1819 = vmatpush1.msra.mxu0 0.0
        %1820 = vmatprep.subr.mxu0 0.0
        %1821 = vmatpush1.msra.mxu0 0.0
        %1822 = vmatprep.subr.mxu0 0.0
        %1823 = vmatpush1.msra.mxu0 0.0
        %1824 = vmatprep.subr.mxu0 0.0
        %1825 = vmatpush1.msra.mxu0 0.0
        %1826 = vmatprep.subr.mxu0 0.0
        %1827 = vmatpush1.msra.mxu0 0.0
        %1828 = vmatprep.subr.mxu0 0.0
        %1829 = vmatpush1.msra.mxu0 0.0
        %1830 = vmatprep.subr.mxu0 0.0
        %1831 = vmatpush1.msra.mxu0 0.0
        %1832 = vmatprep.subr.mxu0 0.0
        %1833 = vmatpush1.msra.mxu0 0.0
        %1834 = vmatprep.subr.mxu0 0.0
        %1835 = vmatpush1.msra.mxu0 0.0
        %1836 = vmatprep.subr.mxu0 0.0
        %1837 = vmatpush1.msra.mxu0 0.0
        %1838 = vmatprep.subr.mxu0 0.0
        %1839 = vmatpush1.msra.mxu0 0.0
        %1840 = vmatprep.subr.mxu0 0.0
        %1841 = vmatpush1.msra.mxu0 0.0
        %1842 = vmatprep.mubr.f32.mxu0 0.0
        %1843 = vmatmul.mubr.f32.gmra.mrb[0].mxu0 %v1395
        %v1844 = vpop.f32.mrb[0].mxu0
        %v1845 = vadd.f32 0.0, %v1844
        %v1846 = vpop.f32.mrb[0].mxu0
        %1847 = vmatprep.mubr.f32.mxu0 0.0
        %1848 = vmatmul.mubr.f32.gmra.mrb[0].mxu0 %v1398
        %v1849 = vpop.f32.mrb[0].mxu0
        %v1850 = vadd.f32 0.0, %v1849
        %v1851 = vpop.f32.mrb[0].mxu0
        %1852 = vmatprep.mubr.f32.mxu0 0.0
        %1853 = vmatmul.mubr.f32.gmra.mrb[0].mxu0 %v1401
        %v1854 = vpop.f32.mrb[0].mxu0
        %v1855 = vadd.f32 0.0, %v1854
        %v1856 = vpop.f32.mrb[0].mxu0
        %1857 = vmatprep.mubr.f32.mxu0 0.0
        %1858 = vmatmul.mubr.f32.gmra.mrb[0].mxu0 %v1404
        %v1859 = vpop.f32.mrb[0].mxu0
        %v1860 = vadd.f32 0.0, %v1859
        %v1861 = vpop.f32.mrb[0].mxu0
        %1862 = vdwg.mxu0
        %v1863 = vmul.f32 %v1845, 0.11111111
        %v1864 = vmul.f32 %v1850, 0.11111111
        %v1865 = vmul.f32 %v1855, 0.11111111
        %v1866 = vmul.f32 %v1860, 0.11111111
        %v1867 = vmul.f32 %v1491, %v1491
        %v1868 = vmul.f32 %v1492, %v1492
        %v1869 = vmul.f32 %v1493, %v1493
        %v1870 = vmul.f32 %v1494, %v1494
        %v1871 = vsub.f32 %v1677, %v1867
        %v1872 = vsub.f32 %v1678, %v1868
        %v1873 = vsub.f32 %v1679, %v1869
        %v1874 = vsub.f32 %v1680, %v1870
        %v1875 = vmul.f32 %v1584, %v1584
        %v1876 = vmul.f32 %v1585, %v1585
        %v1877 = vmul.f32 %v1586, %v1586
        %v1878 = vmul.f32 %v1587, %v1587
        %v1879 = vsub.f32 %v1770, %v1875
        %v1880 = vsub.f32 %v1771, %v1876
        %v1881 = vsub.f32 %v1772, %v1877
        %v1882 = vsub.f32 %v1773, %v1878
        %v1883 = vmul.f32 %v1491, %v1584
        %v1884 = vmul.f32 %v1492, %v1585
        %v1885 = vmul.f32 %v1493, %v1586
        %v1886 = vmul.f32 %v1494, %v1587
        %v1887 = vsub.f32 %v1863, %v1883
        %v1888 = vsub.f32 %v1864, %v1884
        %v1889 = vsub.f32 %v1865, %v1885
        %v1890 = vsub.f32 %v1866, %v1886
        %v1891 = vmul.f32 %v1491, 2.0
        %v1892 = vmul.f32 %v1492, 2.0
        %v1893 = vmul.f32 %v1493, 2.0
        %v1894 = vmul.f32 %v1494, 2.0
        %v1895 = vmul.f32 %v1891, %v1584
        %v1896 = vmul.f32 %v1892, %v1585
        %v1897 = vmul.f32 %v1893, %v1586
        %v1898 = vmul.f32 %v1894, %v1587
        %v1899 = vadd.f32 %v1895, 0.0001
        %v1900 = vadd.f32 %v1896, 0.0001
        %v1901 = vadd.f32 %v1897, 0.0001
        %v1902 = vadd.f32 %v1898, 0.0001
        %v1903 = vmul.f32 %v1887, 2.0
        %v1904 = vmul.f32 %v1888, 2.0
        %v1905 = vmul.f32 %v1889, 2.0
        %v1906 = vmul.f32 %v1890, 2.0
        %v1907 = vadd.f32 %v1903, 0.0009
        %v1908 = vadd.f32 %v1904, 0.0009
        %v1909 = vadd.f32 %v1905, 0.0009
        %v1910 = vadd.f32 %v1906, 0.0009
        %v1911 = vmul.f32 %v1899, %v1907
        %v1912 = vmul.f32 %v1900, %v1908
        %v1913 = vmul.f32 %v1901, %v1909
        %v1914 = vmul.f32 %v1902, %v1910
        %v1915 = vadd.f32 %v1867, %v1875
        %v1916 = vadd.f32 %v1868, %v1876
        %v1917 = vadd.f32 %v1869, %v1877
        %v1918 = vadd.f32 %v1870, %v1878
        %v1919 = vadd.f32 %v1915, 0.0001
        %v1920 = vadd.f32 %v1916, 0.0001
        %v1921 = vadd.f32 %v1917, 0.0001
        %v1922 = vadd.f32 %v1918, 0.0001
        %v1923 = vadd.f32 %v1871, %v1879
        %v1924 = vadd.f32 %v1872, %v1880
        %v1925 = vadd.f32 %v1873, %v1881
        %v1926 = vadd.f32 %v1874, %v1882
        %v1927 = vadd.f32 %v1923, 0.0009
        %v1928 = vadd.f32 %v1924, 0.0009
        %v1929 = vadd.f32 %v1925, 0.0009
        %v1930 = vadd.f32 %v1926, 0.0009
        %v1931 = vmul.f32 %v1919, %v1927
        %v1932 = vmul.f32 %v1920, %v1928
        %v1933 = vmul.f32 %v1921, %v1929
        %v1934 = vmul.f32 %v1922, %v1930
        %v1935 = vrcp.pop %v1931
        %v1936 = vmul.f32 %v1911, %v1935
        %v1937 = vrcp.pop %v1932
        %v1938 = vmul.f32 %v1912, %v1937
        %v1939 = vrcp.pop %v1933
        %v1940 = vmul.f32 %v1913, %v1939
        %v1941 = vrcp.pop %v1934
        %v1942 = vmul.f32 %v1914, %v1941
        %p1943 = scmp.eq.s32.totalorder %s36, 1
        %v1944 = vlaneseq
        %v1945 = vshrl.u32 %v1944, 7
        %v1946 = vadd.s32 %v1945, 8
        %v1947 = vadd.s32 %v1945, 16
        %v1948 = vadd.s32 %v1945, 24
        %s1949 = smul.u32 %s36, 16
        %v1950 = vsub.s32 %v1945, 8
        %v1951 = vsub.s32 %v1947, 8
        %v1952 = vsub.s32 %v1948, 8
        %v1953 = vstv %s1949
        %v1954 = vadd.s32 %v1953, %v1950
        %v1955 = vadd.s32 %v1953, %v1945
        %v1956 = vadd.s32 %v1953, %v1951
        %v1957 = vadd.s32 %v1953, %v1952
        %s1958 = scalar_select %p1943, 23, 22
        %vm1959 = vcmp.ge.s32.totalorder %v1945, 7
        %vm1960 = vcmp.ge.s32.totalorder %v1946, 7
        %vm1961 = vcmp.ge.s32.totalorder %v1947, 7
        %vm1962 = vcmp.ge.s32.totalorder %v1948, 7
        %v1963 = vstv %s1958
        %vm1964 = vcmp.le.s32.totalorder %v1945, %v1963
        %vm1965 = vcmp.le.s32.totalorder %v1946, %v1963
        %vm1966 = vcmp.le.s32.totalorder %v1947, %v1963
        %vm1967 = vcmp.le.s32.totalorder %v1948, %v1963
        %vm1968 = vmand %vm1959, %vm1964
        %vm1969 = vmand %vm1960, %vm1965
        %vm1970 = vmand %vm1961, %vm1966
        %vm1971 = vmand %vm1962, %vm1967
        %vm1972 = vcmp.ge.s32.totalorder %v1954, 0
        %vm1973 = vcmp.ge.s32.totalorder %v1955, 0
        %vm1974 = vcmp.ge.s32.totalorder %v1956, 0
        %vm1975 = vcmp.ge.s32.totalorder %v1957, 0
        %vm1976 = vmand %vm1968, %vm1972
        %vm1977 = vmand %vm1969, %vm1973
        %vm1978 = vmand %vm1970, %vm1974
        %vm1979 = vmand %vm1971, %vm1975
        %vm1980 = vcmp.lt.s32.totalorder %v1954, 32
        %vm1981 = vcmp.lt.s32.totalorder %v1955, 32
        %vm1982 = vcmp.lt.s32.totalorder %v1956, 32
        %vm1983 = vcmp.lt.s32.totalorder %v1957, 32
        %vm1984 = vmand %vm1976, %vm1980
        %vm1985 = vmand %vm1977, %vm1981
        %vm1986 = vmand %vm1978, %vm1982
        %vm1987 = vmand %vm1979, %vm1983
        %v1988 = vsel %vm1984, 1, 0
        %v1989 = vsel %vm1985, 1, 0
        %v1990 = vsel %vm1986, 1, 0
        %v1991 = vsel %vm1987, 1, 0
        %v1992 = vcvt.s32.f32 %v1988
        %v1993 = vcvt.s32.f32 %v1989
        %v1994 = vcvt.s32.f32 %v1990
        %v1995 = vcvt.s32.f32 %v1991
        %v1996 = vand.u32 2147483647, %v510
        %v1997 = vand.u32 2147483647, %v511
        %v1998 = vadd.f32 %v1996, %v1997
        %v1999 = vrot.slane %v1998, 4
        %v2000 = vadd.f32 %v1998, %v1999
        %v2001 = vrot.slane %v2000, 2
        %v2002 = vadd.f32 %v2000, %v2001
        %v2003 = vrot.slane %v2002, 1
        %v2004 = vadd.f32 %v2002, %v2003
        %v2005 = vand.u32 2147483647, %v1263
        %v2006 = vand.u32 2147483647, %v1268
        %v2007 = vand.u32 2147483647, %v1273
        %v2008 = vand.u32 2147483647, %v1278
        %v2009 = vmul.f32 %v2005, %v1992
        %v2010 = vmul.f32 %v2006, %v1993
        %v2011 = vmul.f32 %v2007, %v1994
        %v2012 = vmul.f32 %v2008, %v1995
        %v2013 = vadd.f32 %v2009, %v2010
        %v2014 = vadd.f32 %v2013, %v2011
        %v2015 = vadd.f32 %v2014, %v2012
        %v2016 = vrot.slane %v2015, 4
        %v2017 = vadd.f32 %v2015, %v2016
        %v2018 = vrot.slane %v2017, 2
        %v2019 = vadd.f32 %v2017, %v2018
        %v2020 = vrot.slane %v2019, 1
        %v2021 = vadd.f32 %v2019, %v2020
        %v2022 = vand.u32 2147483647, %v1368
        %v2023 = vand.u32 2147483647, %v1373
        %v2024 = vand.u32 2147483647, %v1378
        %v2025 = vand.u32 2147483647, %v1383
        %v2026 = vmul.f32 %v2022, %v1992
        %v2027 = vmul.f32 %v2023, %v1993
        %v2028 = vmul.f32 %v2024, %v1994
        %v2029 = vmul.f32 %v2025, %v1995
        %v2030 = vadd.f32 %v2026, %v2027
        %v2031 = vadd.f32 %v2030, %v2028
        %v2032 = vadd.f32 %v2031, %v2029
        %v2033 = vrot.slane %v2032, 4
        %v2034 = vadd.f32 %v2032, %v2033
        %v2035 = vrot.slane %v2034, 2
        %v2036 = vadd.f32 %v2034, %v2035
        %v2037 = vrot.slane %v2036, 1
        %v2038 = vadd.f32 %v2036, %v2037
        %v2039 = vmul.f32 %v1936, %v1992
        %v2040 = vmul.f32 %v1938, %v1993
        %v2041 = vmul.f32 %v1940, %v1994
        %v2042 = vmul.f32 %v1942, %v1995
        %v2043 = vadd.f32 %v2039, %v2040
        %v2044 = vadd.f32 %v2043, %v2041
        %v2045 = vadd.f32 %v2044, %v2042
        %v2046 = vrot.slane %v2045, 4
        %v2047 = vadd.f32 %v2045, %v2046
        %v2048 = vrot.slane %v2047, 2
        %v2049 = vadd.f32 %v2047, %v2048
        %v2050 = vrot.slane %v2049, 1
        %v2051 = vadd.f32 %v2049, %v2050
        %v2052 = vld [vmem:[%s470] sm:$0xf]
        %vm2053 = vcmask 1040384
        %v2054 = vsel %vm2053, %v2004, %v2021
        %vm2055 = vcmask 1041408
        %v2056 = vsel %vm2055, %v2054, %v2038
        %vm2057 = vcmask 1042432
        %v2058 = vsel %vm2057, %v2056, %v2051
        %v2059 = vadd.f32 %v2052, %v2058
        %2060 = vst [vmem:[%s470] sm:$0xf] %v2059
        %v2061 = vld [vmem:[#allocation2 + $0x16] sm:$0x3]
        %2062 = vst [vmem:[#allocation2 + $0x6] sm:$0x3] %v2061
        %v2063 = vld [vmem:[%s696 + $0x16] sm:$0x3]
        %2064 = vst [vmem:[%s696 + $0x6] sm:$0x3] %v2063
        %v2065 = vld [vmem:[%s790 + $0x16] sm:$0x3]
        %2066 = vst [vmem:[%s790 + $0x6] sm:$0x3] %v2065
        %v2067 = vld [vmem:[%s884 + $0x16] sm:$0x3]
        %2068 = vst [vmem:[%s884 + $0x6] sm:$0x3] %v2067
        %v2069 = vld [vmem:[%s980 + $0x16] sm:$0x3]
        %2070 = vst [vmem:[%s980 + $0x6] sm:$0x3] %v2069
        %v2071 = vld [vmem:[%s1076 + $0x16] sm:$0x3]
        %2072 = vst [vmem:[%s1076 + $0x6] sm:$0x3] %v2071
        %v2073 = vld [vmem:[%s1172 + $0x16] sm:$0x3]
        %2074 = vst [vmem:[%s1172 + $0x6] sm:$0x3] %v2073
        %s2075 = sand.u32 %s233, 1
        %s2076 = scalar_lea.sflag [#allocation5], %s2075
        %s2077 = sand.u32 %s233, 1
        %s2078 = smul.addr %s2077, 4
        %s2079 = scalar_lea.vmem [#allocation17], %s2078
        // Predicated region
        $region89: #{tpu_custom_call.1} parent=51 // pred_check
          %p2080 = pneg %p243
        $region90: #{tpu_custom_call.1} parent=51 // pred_check_branch
          %2082 = sbr.rel (%p2080) target = $region92
        $region91: #{tpu_custom_call.1} parent=51 // pred_region
          %s2084 = ssub.s32 64, 64
          %2085 = vsyncadd %s2076, %s2084
          %s2086 = smul.addr %s35, 64
          %s2087 = scalar_lea.hbm %s8, %s2086
          %s2089 = sshll.u32 %s2079, 4
          %s2090 = int_to_ptr.vmem [resolvable:$true] %s2089
          %2092 = dma.vmem_to_hbm [thread:$0]  %s2090, 64, %s2087, %s2076
        $region92: #{tpu_custom_call.1} parent=51 // pred_fallthru
          _
      $region52: #{tpu_custom_call.1} parent=5 // pred_fallthru
        _
      %p2093 = scmp.le.s32.totalorder 2, %s26
      // Predicated region
      $region93: #{tpu_custom_call.1} parent=5 // pred_check
        %p2094 = pneg %p2093
      $region94: #{tpu_custom_call.1} parent=5 // pred_check_branch
        %2096 = sbr.rel (%p2094) target = $region96
      $region95: #{tpu_custom_call.1} parent=5 // pred_region
        %s2097 = ssub.s32 %s26, 2
        // Predicated region
        $region97: #{tpu_custom_call.1} parent=95 // pred_check
          %p2098 = pneg %p249
        $region98: #{tpu_custom_call.1} parent=95 // pred_check_branch
          %2100 = sbr.rel (%p2098) target = $region100
        $region99: #{tpu_custom_call.1} parent=95 // pred_region
          %s2101 = sand.u32 %s234, 1
          %s2102 = scalar_lea.sflag [#allocation5], %s2101
          %s2103 = sand.u32 %s234, 1
          %s2104 = smul.addr %s2103, 4
          %s2105 = scalar_lea.vmem [#allocation17], %s2104
          %2106 = dma.done %s2102, 64
        $region100: #{tpu_custom_call.1} parent=95 // pred_fallthru
          _
      $region96: #{tpu_custom_call.1} parent=5 // pred_fallthru
        _
    $region6: #{tpu_custom_call.1} parent=1 // loop_footer
      %s30 = sadd.s32 1, %s26
    $region7: #{tpu_custom_call.1} parent=1 // loop_footer_branch
      %25 = sbr.rel target = $region3
    $region8: #{tpu_custom_call.1} parent=1 // loop_exit
      _
    %2107 = vsyncpa [#allocation4], 1
    %s2108 = scalar_lea.sflag [#allocation4], 1
    %2109 = vsyncpa %s2108, 1
    %2110 = vsyncpa [#allocation7], 1
    %s2111 = scalar_lea.sflag [#allocation7], 1
    %2112 = vsyncpa %s2111, 1
    %2113 = vsyncpa [#allocation10], 1
    %2114 = vsyncpa [#allocation13], 1
    %2115 = vsyncpa [#allocation16], 1
    %2116 = vsyncpa [#allocation5], 1
    %s2117 = scalar_lea.sflag [#allocation5], 1
    %2118 = vsyncpa %s2117, 1

</llo_original>
